<compile_context>
chip_gen: v6e
topology: v6e:2x2x1
jax: 0.10.0
libtpu: 0.0.40
codegen_flags: <defaults>
</compile_context>

<pallas_src>
import functools

import jax
import jax.numpy as jnp
from jax.experimental import pallas as pl
from jax.experimental.pallas import tpu as pltpu

NUM_LAYERS = 6
LN_EPS = 1e-5


def fused_encoder_kernel(x_ref, w1_ref, b1_ref, w2_ref, b2_ref,
                         gamma_ref, beta_ref, o_ref, *, num_layers):
    # x_ref: (tm, D) f32   w1: (D, F) bf16   w2: (F, D) bf16
    # b1: (1, F) f32       b2/gamma/beta: (1, D) f32
    x = x_ref[...].astype(jnp.float32)          # activation tile, VMEM-resident
    w1 = w1_ref[...]                            # loop-invariant weights
    w2 = w2_ref[...]
    b1 = b1_ref[...].astype(jnp.float32)        # hoisted out of the layer loop
    b2 = b2_ref[...].astype(jnp.float32)
    gamma = gamma_ref[...].astype(jnp.float32)
    beta = beta_ref[...].astype(jnp.float32)

    def layer(_, z):
        # Linear1 + ReLU : bf16 MXU matmul, f32 accumulation (VPU for ReLU).
        h = jnp.dot(z.astype(jnp.bfloat16), w1,
                    preferred_element_type=jnp.float32) + b1
        h = jnp.maximum(h, 0.0)
        # Linear2 + residual.
        y = jnp.dot(h.astype(jnp.bfloat16), w2,
                    preferred_element_type=jnp.float32) + b2
        r = z + y
        # LayerNorm over the lane (feature) axis, all f32.
        mean = jnp.mean(r, axis=-1, keepdims=True)
        cen = r - mean
        var = jnp.mean(cen * cen, axis=-1, keepdims=True)
        return cen * jax.lax.rsqrt(var + LN_EPS) * gamma + beta

    z = jax.lax.fori_loop(0, num_layers, layer, x, unroll=True)
    o_ref[...] = z.astype(o_ref.dtype)


@functools.partial(jax.jit, static_argnames=("num_layers", "tm"))
def _fused_encoder_2d(x2d, w1, b1, w2, b2, gamma, beta, *, num_layers, tm):
    M, D = x2d.shape
    F = w1.shape[1]
    grid = (M // tm,)

    flops = 2 * 2 * M * D * F * num_layers           # two matmuls per layer
    bytes_accessed = (2 * M * D * 4                  # activation in + out (f32)
                      + (D * F + F * D) * 2          # bf16 weights
                      + (F + 3 * D) * 4)             # biases, gamma, beta
    cost = pl.CostEstimate(flops=flops,
                           transcendentals=M * num_layers,   # rsqrt per row/layer
                           bytes_accessed=bytes_accessed)

    return pl.pallas_call(
        functools.partial(fused_encoder_kernel, num_layers=num_layers),
        out_shape=jax.ShapeDtypeStruct((M, D), x2d.dtype),
        grid_spec=pltpu.PrefetchScalarGridSpec(
            num_scalar_prefetch=0,
            grid=grid,
            in_specs=[
                pl.BlockSpec((tm, D), lambda i: (i, 0)),   # x row tile
                pl.BlockSpec((D, F), lambda i: (0, 0)),    # w1 (constant index)
                pl.BlockSpec((1, F), lambda i: (0, 0)),    # b1
                pl.BlockSpec((F, D), lambda i: (0, 0)),    # w2 (constant index)
                pl.BlockSpec((1, D), lambda i: (0, 0)),    # b2
                pl.BlockSpec((1, D), lambda i: (0, 0)),    # gamma
                pl.BlockSpec((1, D), lambda i: (0, 0)),    # beta
            ],
            out_specs=pl.BlockSpec((tm, D), lambda i: (i, 0)),
        ),
        compiler_params=pltpu.CompilerParams(
            dimension_semantics=("parallel",),
            vmem_limit_bytes=32 * 1024 * 1024),
        cost_estimate=cost,
    )(x2d, w1, b1, w2, b2, gamma, beta)


def _choose_tm(M):
    """Largest row tile <=256 that still leaves >=2 grid steps (v7x: 2 TCs)."""
    for tm in (256, 128, 64, 32, 16, 8):
        if M >= 2 * tm:
            return tm
    return 8


def encoder_forward(x, params, num_layers=NUM_LAYERS):
    """x: (batch, seq, d_model). Applies the same layer params num_layers times
    (deepcopy semantics of the reference Encoder)."""
    B, S, D = x.shape
    w1, b1, w2, b2, gamma, beta = params
    M = B * S
    x2d = x.reshape(M, D)
    tm = _choose_tm(M)
    M_pad = ((M + tm - 1) // tm) * tm
    if M_pad != M:
        x2d = jnp.pad(x2d, ((0, M_pad - M), (0, 0)))
    out2d = _fused_encoder_2d(
        x2d,
        w1.astype(jnp.bfloat16), b1.astype(jnp.float32),
        w2.astype(jnp.bfloat16), b2.astype(jnp.float32),
        gamma.astype(jnp.float32), beta.astype(jnp.float32),
        num_layers=num_layers, tm=tm)
    return out2d[:M].reshape(B, S, D)


def _reference_forward(x, params, num_layers=NUM_LAYERS):
    """Pure-JAX reference mirroring the kernel numerics (bf16 matmuls with f32
    accumulation, f32 residual/LayerNorm)."""
    w1, b1, w2, b2, gamma, beta = params
    w1b = w1.astype(jnp.bfloat16)
    w2b = w2.astype(jnp.bfloat16)
    B, S, D = x.shape
    z = x.reshape(B * S, D).astype(jnp.float32)
    for _ in range(num_layers):
        h = jnp.dot(z.astype(jnp.bfloat16), w1b,
                    preferred_element_type=jnp.float32) + b1
        h = jnp.maximum(h, 0.0)
        y = jnp.dot(h.astype(jnp.bfloat16), w2b,
                    preferred_element_type=jnp.float32) + b2
        r = z + y
        mean = r.mean(-1, keepdims=True)
        var = ((r - mean) ** 2).mean(-1, keepdims=True)
        z = (r - mean) * jax.lax.rsqrt(var + LN_EPS) * gamma + beta
    return z.reshape(B, S, D)


if __name__ == "__main__":
    # Small, lane-dense demo shapes: d_model / d_ff are multiples of 128.
    batch, seq, d_model, d_ff = 2, 64, 128, 256
    num_layers = NUM_LAYERS

    key = jax.random.PRNGKey(0)
    kx, k1, k2, k3, k4 = jax.random.split(key, 5)

    x = jax.random.normal(kx, (batch, seq, d_model), dtype=jnp.float32)

    # One deterministic parameter set shared by all layers (deepcopy semantics).
    w1 = jax.random.normal(k1, (d_model, d_ff), dtype=jnp.float32) * 0.05
    b1 = jax.random.normal(k2, (1, d_ff), dtype=jnp.float32) * 0.01
    w2 = jax.random.normal(k3, (d_ff, d_model), dtype=jnp.float32) * 0.05
    b2 = jax.random.normal(k4, (1, d_model), dtype=jnp.float32) * 0.01
    gamma = jnp.ones((1, d_model), dtype=jnp.float32)
    beta = jnp.zeros((1, d_model), dtype=jnp.float32)
    params = (w1, b1, w2, b2, gamma, beta)

    out = encoder_forward(x, params, num_layers=num_layers)
    out = jax.block_until_ready(out)

    ref = _reference_forward(x, params, num_layers=num_layers)
    assert out.shape == (batch, seq, d_model)
    assert jnp.allclose(out, ref, atol=5e-3, rtol=5e-3), "mismatch vs reference"

    print("KERNEL_OK")
</pallas_src>

<mosaic_0001>
module attributes {stable_mosaic.version = 11 : i64} {
  func.func @fused_encoder_kernel(%arg0: i32, %arg1: memref<64x128xf32, #tpu.memory_space<vmem>>, %arg2: memref<128x256xbf16, #tpu.memory_space<vmem>>, %arg3: memref<1x256xf32, #tpu.memory_space<vmem>>, %arg4: memref<256x128xbf16, #tpu.memory_space<vmem>>, %arg5: memref<1x128xf32, #tpu.memory_space<vmem>>, %arg6: memref<1x128xf32, #tpu.memory_space<vmem>>, %arg7: memref<1x128xf32, #tpu.memory_space<vmem>>, %arg8: memref<64x128xf32, #tpu.memory_space<vmem>>) attributes {dimension_semantics = [#tpu.dimension_semantics<parallel>], iteration_bounds = array<i64: 2>, scalar_prefetch = 0 : i64, scratch_operands = 0 : i64, tpu.core_type = #tpu.core_type<tc>, window_params = [{transform_indices = @transform_0, window_bounds = array<i64: 64, 128>}, {pipeline_mode = #tpu.pipeline_mode<synchronous>, transform_indices = @transform_1, window_bounds = array<i64: 128, 256>}, {pipeline_mode = #tpu.pipeline_mode<synchronous>, transform_indices = @transform_2, window_bounds = array<i64: 1, 256>}, {pipeline_mode = #tpu.pipeline_mode<synchronous>, transform_indices = @transform_3, window_bounds = array<i64: 256, 128>}, {pipeline_mode = #tpu.pipeline_mode<synchronous>, transform_indices = @transform_4, window_bounds = array<i64: 1, 128>}, {pipeline_mode = #tpu.pipeline_mode<synchronous>, transform_indices = @transform_5, window_bounds = array<i64: 1, 128>}, {pipeline_mode = #tpu.pipeline_mode<synchronous>, transform_indices = @transform_6, window_bounds = array<i64: 1, 128>}, {transform_indices = @transform_7, window_bounds = array<i64: 64, 128>}]} {
    %c0 = arith.constant 0 : index
    %c0_0 = arith.constant 0 : index
    %0 = vector.load %arg1[%c0, %c0_0] : memref<64x128xf32, #tpu.memory_space<vmem>>, vector<64x128xf32>
    %c0_1 = arith.constant 0 : index
    %c0_2 = arith.constant 0 : index
    %1 = vector.load %arg2[%c0_1, %c0_2] : memref<128x256xbf16, #tpu.memory_space<vmem>>, vector<128x256xbf16>
    %c0_3 = arith.constant 0 : index
    %c0_4 = arith.constant 0 : index
    %2 = vector.load %arg4[%c0_3, %c0_4] : memref<256x128xbf16, #tpu.memory_space<vmem>>, vector<256x128xbf16>
    %c0_5 = arith.constant 0 : index
    %c0_6 = arith.constant 0 : index
    %3 = vector.load %arg3[%c0_5, %c0_6] : memref<1x256xf32, #tpu.memory_space<vmem>>, vector<1x256xf32>
    %c0_7 = arith.constant 0 : index
    %c0_8 = arith.constant 0 : index
    %4 = vector.load %arg5[%c0_7, %c0_8] : memref<1x128xf32, #tpu.memory_space<vmem>>, vector<1x128xf32>
    %c0_9 = arith.constant 0 : index
    %c0_10 = arith.constant 0 : index
    %5 = vector.load %arg6[%c0_9, %c0_10] : memref<1x128xf32, #tpu.memory_space<vmem>>, vector<1x128xf32>
    %c0_11 = arith.constant 0 : index
    %c0_12 = arith.constant 0 : index
    %6 = vector.load %arg7[%c0_11, %c0_12] : memref<1x128xf32, #tpu.memory_space<vmem>>, vector<1x128xf32>
    %c0_i32 = arith.constant 0 : i32
    %7 = arith.truncf %0 : vector<64x128xf32> to vector<64x128xbf16>
    %cst = arith.constant dense<0.000000e+00> : vector<64x256xf32>
    %8 = tpu.matmul %7, %1, %cst {dimension_numbers = #tpu.dot_dimension_numbers<[1], [0], [0], [1], [0, 0, 1, 1], [], []>} : vector<64x128xbf16>, vector<128x256xbf16>, vector<64x256xf32> -> vector<64x256xf32>
    %9 = vector.broadcast %3 : vector<1x256xf32> to vector<64x256xf32>
    %10 = arith.addf %8, %9 : vector<64x256xf32>
    %cst_13 = arith.constant 0.000000e+00 : f32
    %11 = vector.broadcast %cst_13 : f32 to vector<64x256xf32>
    %12 = arith.maximumf %10, %11 : vector<64x256xf32>
    %13 = arith.truncf %12 : vector<64x256xf32> to vector<64x256xbf16>
    %cst_14 = arith.constant dense<0.000000e+00> : vector<64x128xf32>
    %14 = tpu.matmul %13, %2, %cst_14 {dimension_numbers = #tpu.dot_dimension_numbers<[1], [0], [0], [1], [0, 0, 1, 1], [], []>} : vector<64x256xbf16>, vector<256x128xbf16>, vector<64x128xf32> -> vector<64x128xf32>
    %15 = vector.broadcast %4 : vector<1x128xf32> to vector<64x128xf32>
    %16 = arith.addf %14, %15 : vector<64x128xf32>
    %17 = arith.addf %0, %16 : vector<64x128xf32>
    %cst_15 = arith.constant dense<0.000000e+00> : vector<64xf32>
    %18 = vector.multi_reduction <add>, %17, %cst_15 [1] : vector<64x128xf32> to vector<64xf32>
    %19 = vector.shape_cast %18 : vector<64xf32> to vector<64x1xf32>
    %cst_16 = arith.constant 1.280000e+02 : f32
    %20 = vector.broadcast %cst_16 : f32 to vector<64x1xf32>
    %21 = arith.divf %19, %20 : vector<64x1xf32>
    %22 = vector.broadcast %21 : vector<64x1xf32> to vector<64x128xf32>
    %23 = arith.subf %17, %22 : vector<64x128xf32>
    %24 = arith.mulf %23, %23 : vector<64x128xf32>
    %cst_17 = arith.constant dense<0.000000e+00> : vector<64xf32>
    %25 = vector.multi_reduction <add>, %24, %cst_17 [1] : vector<64x128xf32> to vector<64xf32>
    %26 = vector.shape_cast %25 : vector<64xf32> to vector<64x1xf32>
    %cst_18 = arith.constant 1.280000e+02 : f32
    %27 = vector.broadcast %cst_18 : f32 to vector<64x1xf32>
    %28 = arith.divf %26, %27 : vector<64x1xf32>
    %cst_19 = arith.constant 9.99999974E-6 : f32
    %29 = vector.broadcast %cst_19 : f32 to vector<64x1xf32>
    %30 = arith.addf %28, %29 : vector<64x1xf32>
    %31 = math.rsqrt %30 : vector<64x1xf32>
    %32 = vector.broadcast %31 : vector<64x1xf32> to vector<64x128xf32>
    %33 = arith.mulf %23, %32 : vector<64x128xf32>
    %34 = vector.broadcast %5 : vector<1x128xf32> to vector<64x128xf32>
    %35 = arith.mulf %33, %34 : vector<64x128xf32>
    %36 = vector.broadcast %6 : vector<1x128xf32> to vector<64x128xf32>
    %37 = arith.addf %35, %36 : vector<64x128xf32>
    %c1_i32 = arith.constant 1 : i32
    %38 = arith.truncf %37 : vector<64x128xf32> to vector<64x128xbf16>
    %cst_20 = arith.constant dense<0.000000e+00> : vector<64x256xf32>
    %39 = tpu.matmul %38, %1, %cst_20 {dimension_numbers = #tpu.dot_dimension_numbers<[1], [0], [0], [1], [0, 0, 1, 1], [], []>} : vector<64x128xbf16>, vector<128x256xbf16>, vector<64x256xf32> -> vector<64x256xf32>
    %40 = vector.broadcast %3 : vector<1x256xf32> to vector<64x256xf32>
    %41 = arith.addf %39, %40 : vector<64x256xf32>
    %cst_21 = arith.constant 0.000000e+00 : f32
    %42 = vector.broadcast %cst_21 : f32 to vector<64x256xf32>
    %43 = arith.maximumf %41, %42 : vector<64x256xf32>
    %44 = arith.truncf %43 : vector<64x256xf32> to vector<64x256xbf16>
    %cst_22 = arith.constant dense<0.000000e+00> : vector<64x128xf32>
    %45 = tpu.matmul %44, %2, %cst_22 {dimension_numbers = #tpu.dot_dimension_numbers<[1], [0], [0], [1], [0, 0, 1, 1], [], []>} : vector<64x256xbf16>, vector<256x128xbf16>, vector<64x128xf32> -> vector<64x128xf32>
    %46 = vector.broadcast %4 : vector<1x128xf32> to vector<64x128xf32>
    %47 = arith.addf %45, %46 : vector<64x128xf32>
    %48 = arith.addf %37, %47 : vector<64x128xf32>
    %cst_23 = arith.constant dense<0.000000e+00> : vector<64xf32>
    %49 = vector.multi_reduction <add>, %48, %cst_23 [1] : vector<64x128xf32> to vector<64xf32>
    %50 = vector.shape_cast %49 : vector<64xf32> to vector<64x1xf32>
    %cst_24 = arith.constant 1.280000e+02 : f32
    %51 = vector.broadcast %cst_24 : f32 to vector<64x1xf32>
    %52 = arith.divf %50, %51 : vector<64x1xf32>
    %53 = vector.broadcast %52 : vector<64x1xf32> to vector<64x128xf32>
    %54 = arith.subf %48, %53 : vector<64x128xf32>
    %55 = arith.mulf %54, %54 : vector<64x128xf32>
    %cst_25 = arith.constant dense<0.000000e+00> : vector<64xf32>
    %56 = vector.multi_reduction <add>, %55, %cst_25 [1] : vector<64x128xf32> to vector<64xf32>
    %57 = vector.shape_cast %56 : vector<64xf32> to vector<64x1xf32>
    %cst_26 = arith.constant 1.280000e+02 : f32
    %58 = vector.broadcast %cst_26 : f32 to vector<64x1xf32>
    %59 = arith.divf %57, %58 : vector<64x1xf32>
    %cst_27 = arith.constant 9.99999974E-6 : f32
    %60 = vector.broadcast %cst_27 : f32 to vector<64x1xf32>
    %61 = arith.addf %59, %60 : vector<64x1xf32>
    %62 = math.rsqrt %61 : vector<64x1xf32>
    %63 = vector.broadcast %62 : vector<64x1xf32> to vector<64x128xf32>
    %64 = arith.mulf %54, %63 : vector<64x128xf32>
    %65 = vector.broadcast %5 : vector<1x128xf32> to vector<64x128xf32>
    %66 = arith.mulf %64, %65 : vector<64x128xf32>
    %67 = vector.broadcast %6 : vector<1x128xf32> to vector<64x128xf32>
    %68 = arith.addf %66, %67 : vector<64x128xf32>
    %c2_i32 = arith.constant 2 : i32
    %69 = arith.truncf %68 : vector<64x128xf32> to vector<64x128xbf16>
    %cst_28 = arith.constant dense<0.000000e+00> : vector<64x256xf32>
    %70 = tpu.matmul %69, %1, %cst_28 {dimension_numbers = #tpu.dot_dimension_numbers<[1], [0], [0], [1], [0, 0, 1, 1], [], []>} : vector<64x128xbf16>, vector<128x256xbf16>, vector<64x256xf32> -> vector<64x256xf32>
    %71 = vector.broadcast %3 : vector<1x256xf32> to vector<64x256xf32>
    %72 = arith.addf %70, %71 : vector<64x256xf32>
    %cst_29 = arith.constant 0.000000e+00 : f32
    %73 = vector.broadcast %cst_29 : f32 to vector<64x256xf32>
    %74 = arith.maximumf %72, %73 : vector<64x256xf32>
    %75 = arith.truncf %74 : vector<64x256xf32> to vector<64x256xbf16>
    %cst_30 = arith.constant dense<0.000000e+00> : vector<64x128xf32>
    %76 = tpu.matmul %75, %2, %cst_30 {dimension_numbers = #tpu.dot_dimension_numbers<[1], [0], [0], [1], [0, 0, 1, 1], [], []>} : vector<64x256xbf16>, vector<256x128xbf16>, vector<64x128xf32> -> vector<64x128xf32>
    %77 = vector.broadcast %4 : vector<1x128xf32> to vector<64x128xf32>
    %78 = arith.addf %76, %77 : vector<64x128xf32>
    %79 = arith.addf %68, %78 : vector<64x128xf32>
    %cst_31 = arith.constant dense<0.000000e+00> : vector<64xf32>
    %80 = vector.multi_reduction <add>, %79, %cst_31 [1] : vector<64x128xf32> to vector<64xf32>
    %81 = vector.shape_cast %80 : vector<64xf32> to vector<64x1xf32>
    %cst_32 = arith.constant 1.280000e+02 : f32
    %82 = vector.broadcast %cst_32 : f32 to vector<64x1xf32>
    %83 = arith.divf %81, %82 : vector<64x1xf32>
    %84 = vector.broadcast %83 : vector<64x1xf32> to vector<64x128xf32>
    %85 = arith.subf %79, %84 : vector<64x128xf32>
    %86 = arith.mulf %85, %85 : vector<64x128xf32>
    %cst_33 = arith.constant dense<0.000000e+00> : vector<64xf32>
    %87 = vector.multi_reduction <add>, %86, %cst_33 [1] : vector<64x128xf32> to vector<64xf32>
    %88 = vector.shape_cast %87 : vector<64xf32> to vector<64x1xf32>
    %cst_34 = arith.constant 1.280000e+02 : f32
    %89 = vector.broadcast %cst_34 : f32 to vector<64x1xf32>
    %90 = arith.divf %88, %89 : vector<64x1xf32>
    %cst_35 = arith.constant 9.99999974E-6 : f32
    %91 = vector.broadcast %cst_35 : f32 to vector<64x1xf32>
    %92 = arith.addf %90, %91 : vector<64x1xf32>
    %93 = math.rsqrt %92 : vector<64x1xf32>
    %94 = vector.broadcast %93 : vector<64x1xf32> to vector<64x128xf32>
    %95 = arith.mulf %85, %94 : vector<64x128xf32>
    %96 = vector.broadcast %5 : vector<1x128xf32> to vector<64x128xf32>
    %97 = arith.mulf %95, %96 : vector<64x128xf32>
    %98 = vector.broadcast %6 : vector<1x128xf32> to vector<64x128xf32>
    %99 = arith.addf %97, %98 : vector<64x128xf32>
    %c3_i32 = arith.constant 3 : i32
    %100 = arith.truncf %99 : vector<64x128xf32> to vector<64x128xbf16>
    %cst_36 = arith.constant dense<0.000000e+00> : vector<64x256xf32>
    %101 = tpu.matmul %100, %1, %cst_36 {dimension_numbers = #tpu.dot_dimension_numbers<[1], [0], [0], [1], [0, 0, 1, 1], [], []>} : vector<64x128xbf16>, vector<128x256xbf16>, vector<64x256xf32> -> vector<64x256xf32>
    %102 = vector.broadcast %3 : vector<1x256xf32> to vector<64x256xf32>
    %103 = arith.addf %101, %102 : vector<64x256xf32>
    %cst_37 = arith.constant 0.000000e+00 : f32
    %104 = vector.broadcast %cst_37 : f32 to vector<64x256xf32>
    %105 = arith.maximumf %103, %104 : vector<64x256xf32>
    %106 = arith.truncf %105 : vector<64x256xf32> to vector<64x256xbf16>
    %cst_38 = arith.constant dense<0.000000e+00> : vector<64x128xf32>
    %107 = tpu.matmul %106, %2, %cst_38 {dimension_numbers = #tpu.dot_dimension_numbers<[1], [0], [0], [1], [0, 0, 1, 1], [], []>} : vector<64x256xbf16>, vector<256x128xbf16>, vector<64x128xf32> -> vector<64x128xf32>
    %108 = vector.broadcast %4 : vector<1x128xf32> to vector<64x128xf32>
    %109 = arith.addf %107, %108 : vector<64x128xf32>
    %110 = arith.addf %99, %109 : vector<64x128xf32>
    %cst_39 = arith.constant dense<0.000000e+00> : vector<64xf32>
    %111 = vector.multi_reduction <add>, %110, %cst_39 [1] : vector<64x128xf32> to vector<64xf32>
    %112 = vector.shape_cast %111 : vector<64xf32> to vector<64x1xf32>
    %cst_40 = arith.constant 1.280000e+02 : f32
    %113 = vector.broadcast %cst_40 : f32 to vector<64x1xf32>
    %114 = arith.divf %112, %113 : vector<64x1xf32>
    %115 = vector.broadcast %114 : vector<64x1xf32> to vector<64x128xf32>
    %116 = arith.subf %110, %115 : vector<64x128xf32>
    %117 = arith.mulf %116, %116 : vector<64x128xf32>
    %cst_41 = arith.constant dense<0.000000e+00> : vector<64xf32>
    %118 = vector.multi_reduction <add>, %117, %cst_41 [1] : vector<64x128xf32> to vector<64xf32>
    %119 = vector.shape_cast %118 : vector<64xf32> to vector<64x1xf32>
    %cst_42 = arith.constant 1.280000e+02 : f32
    %120 = vector.broadcast %cst_42 : f32 to vector<64x1xf32>
    %121 = arith.divf %119, %120 : vector<64x1xf32>
    %cst_43 = arith.constant 9.99999974E-6 : f32
    %122 = vector.broadcast %cst_43 : f32 to vector<64x1xf32>
    %123 = arith.addf %121, %122 : vector<64x1xf32>
    %124 = math.rsqrt %123 : vector<64x1xf32>
    %125 = vector.broadcast %124 : vector<64x1xf32> to vector<64x128xf32>
    %126 = arith.mulf %116, %125 : vector<64x128xf32>
    %127 = vector.broadcast %5 : vector<1x128xf32> to vector<64x128xf32>
    %128 = arith.mulf %126, %127 : vector<64x128xf32>
    %129 = vector.broadcast %6 : vector<1x128xf32> to vector<64x128xf32>
    %130 = arith.addf %128, %129 : vector<64x128xf32>
    %c4_i32 = arith.constant 4 : i32
    %131 = arith.truncf %130 : vector<64x128xf32> to vector<64x128xbf16>
    %cst_44 = arith.constant dense<0.000000e+00> : vector<64x256xf32>
    %132 = tpu.matmul %131, %1, %cst_44 {dimension_numbers = #tpu.dot_dimension_numbers<[1], [0], [0], [1], [0, 0, 1, 1], [], []>} : vector<64x128xbf16>, vector<128x256xbf16>, vector<64x256xf32> -> vector<64x256xf32>
    %133 = vector.broadcast %3 : vector<1x256xf32> to vector<64x256xf32>
    %134 = arith.addf %132, %133 : vector<64x256xf32>
    %cst_45 = arith.constant 0.000000e+00 : f32
    %135 = vector.broadcast %cst_45 : f32 to vector<64x256xf32>
    %136 = arith.maximumf %134, %135 : vector<64x256xf32>
    %137 = arith.truncf %136 : vector<64x256xf32> to vector<64x256xbf16>
    %cst_46 = arith.constant dense<0.000000e+00> : vector<64x128xf32>
    %138 = tpu.matmul %137, %2, %cst_46 {dimension_numbers = #tpu.dot_dimension_numbers<[1], [0], [0], [1], [0, 0, 1, 1], [], []>} : vector<64x256xbf16>, vector<256x128xbf16>, vector<64x128xf32> -> vector<64x128xf32>
    %139 = vector.broadcast %4 : vector<1x128xf32> to vector<64x128xf32>
    %140 = arith.addf %138, %139 : vector<64x128xf32>
    %141 = arith.addf %130, %140 : vector<64x128xf32>
    %cst_47 = arith.constant dense<0.000000e+00> : vector<64xf32>
    %142 = vector.multi_reduction <add>, %141, %cst_47 [1] : vector<64x128xf32> to vector<64xf32>
    %143 = vector.shape_cast %142 : vector<64xf32> to vector<64x1xf32>
    %cst_48 = arith.constant 1.280000e+02 : f32
    %144 = vector.broadcast %cst_48 : f32 to vector<64x1xf32>
    %145 = arith.divf %143, %144 : vector<64x1xf32>
    %146 = vector.broadcast %145 : vector<64x1xf32> to vector<64x128xf32>
    %147 = arith.subf %141, %146 : vector<64x128xf32>
    %148 = arith.mulf %147, %147 : vector<64x128xf32>
    %cst_49 = arith.constant dense<0.000000e+00> : vector<64xf32>
    %149 = vector.multi_reduction <add>, %148, %cst_49 [1] : vector<64x128xf32> to vector<64xf32>
    %150 = vector.shape_cast %149 : vector<64xf32> to vector<64x1xf32>
    %cst_50 = arith.constant 1.280000e+02 : f32
    %151 = vector.broadcast %cst_50 : f32 to vector<64x1xf32>
    %152 = arith.divf %150, %151 : vector<64x1xf32>
    %cst_51 = arith.constant 9.99999974E-6 : f32
    %153 = vector.broadcast %cst_51 : f32 to vector<64x1xf32>
    %154 = arith.addf %152, %153 : vector<64x1xf32>
    %155 = math.rsqrt %154 : vector<64x1xf32>
    %156 = vector.broadcast %155 : vector<64x1xf32> to vector<64x128xf32>
    %157 = arith.mulf %147, %156 : vector<64x128xf32>
    %158 = vector.broadcast %5 : vector<1x128xf32> to vector<64x128xf32>
    %159 = arith.mulf %157, %158 : vector<64x128xf32>
    %160 = vector.broadcast %6 : vector<1x128xf32> to vector<64x128xf32>
    %161 = arith.addf %159, %160 : vector<64x128xf32>
    %c5_i32 = arith.constant 5 : i32
    %162 = arith.truncf %161 : vector<64x128xf32> to vector<64x128xbf16>
    %cst_52 = arith.constant dense<0.000000e+00> : vector<64x256xf32>
    %163 = tpu.matmul %162, %1, %cst_52 {dimension_numbers = #tpu.dot_dimension_numbers<[1], [0], [0], [1], [0, 0, 1, 1], [], []>} : vector<64x128xbf16>, vector<128x256xbf16>, vector<64x256xf32> -> vector<64x256xf32>
    %164 = vector.broadcast %3 : vector<1x256xf32> to vector<64x256xf32>
    %165 = arith.addf %163, %164 : vector<64x256xf32>
    %cst_53 = arith.constant 0.000000e+00 : f32
    %166 = vector.broadcast %cst_53 : f32 to vector<64x256xf32>
    %167 = arith.maximumf %165, %166 : vector<64x256xf32>
    %168 = arith.truncf %167 : vector<64x256xf32> to vector<64x256xbf16>
    %cst_54 = arith.constant dense<0.000000e+00> : vector<64x128xf32>
    %169 = tpu.matmul %168, %2, %cst_54 {dimension_numbers = #tpu.dot_dimension_numbers<[1], [0], [0], [1], [0, 0, 1, 1], [], []>} : vector<64x256xbf16>, vector<256x128xbf16>, vector<64x128xf32> -> vector<64x128xf32>
    %170 = vector.broadcast %4 : vector<1x128xf32> to vector<64x128xf32>
    %171 = arith.addf %169, %170 : vector<64x128xf32>
    %172 = arith.addf %161, %171 : vector<64x128xf32>
    %cst_55 = arith.constant dense<0.000000e+00> : vector<64xf32>
    %173 = vector.multi_reduction <add>, %172, %cst_55 [1] : vector<64x128xf32> to vector<64xf32>
    %174 = vector.shape_cast %173 : vector<64xf32> to vector<64x1xf32>
    %cst_56 = arith.constant 1.280000e+02 : f32
    %175 = vector.broadcast %cst_56 : f32 to vector<64x1xf32>
    %176 = arith.divf %174, %175 : vector<64x1xf32>
    %177 = vector.broadcast %176 : vector<64x1xf32> to vector<64x128xf32>
    %178 = arith.subf %172, %177 : vector<64x128xf32>
    %179 = arith.mulf %178, %178 : vector<64x128xf32>
    %cst_57 = arith.constant dense<0.000000e+00> : vector<64xf32>
    %180 = vector.multi_reduction <add>, %179, %cst_57 [1] : vector<64x128xf32> to vector<64xf32>
    %181 = vector.shape_cast %180 : vector<64xf32> to vector<64x1xf32>
    %cst_58 = arith.constant 1.280000e+02 : f32
    %182 = vector.broadcast %cst_58 : f32 to vector<64x1xf32>
    %183 = arith.divf %181, %182 : vector<64x1xf32>
    %cst_59 = arith.constant 9.99999974E-6 : f32
    %184 = vector.broadcast %cst_59 : f32 to vector<64x1xf32>
    %185 = arith.addf %183, %184 : vector<64x1xf32>
    %186 = math.rsqrt %185 : vector<64x1xf32>
    %187 = vector.broadcast %186 : vector<64x1xf32> to vector<64x128xf32>
    %188 = arith.mulf %178, %187 : vector<64x128xf32>
    %189 = vector.broadcast %5 : vector<1x128xf32> to vector<64x128xf32>
    %190 = arith.mulf %188, %189 : vector<64x128xf32>
    %191 = vector.broadcast %6 : vector<1x128xf32> to vector<64x128xf32>
    %192 = arith.addf %190, %191 : vector<64x128xf32>
    %c0_60 = arith.constant 0 : index
    %c0_61 = arith.constant 0 : index
    %193 = vector.load %arg8[%c0_60, %c0_61] : memref<64x128xf32, #tpu.memory_space<vmem>>, vector<64x128xf32>
    tpu.vector_store %arg8[%c0_60, %c0_61], %192 {strides = array<i32>} : memref<64x128xf32, #tpu.memory_space<vmem>>, vector<64x128xf32>,
    return
  }
  func.func @transform_0(%arg0: i32) -> (i32, i32) {
    %c0_i32 = arith.constant 0 : i32
    %c0_i32_0 = arith.constant 0 : i32
    return %arg0, %c0_i32 : i32, i32
  }
  func.func @transform_1(%arg0: i32) -> (i32, i32) {
    %c0_i32 = arith.constant 0 : i32
    %c0_i32_0 = arith.constant 0 : i32
    %c0_i32_1 = arith.constant 0 : i32
    return %c0_i32, %c0_i32_0 : i32, i32
  }
  func.func @transform_2(%arg0: i32) -> (i32, i32) {
    %c0_i32 = arith.constant 0 : i32
    %c0_i32_0 = arith.constant 0 : i32
    %c0_i32_1 = arith.constant 0 : i32
    return %c0_i32, %c0_i32_0 : i32, i32
  }
  func.func @transform_3(%arg0: i32) -> (i32, i32) {
    %c0_i32 = arith.constant 0 : i32
    %c0_i32_0 = arith.constant 0 : i32
    %c0_i32_1 = arith.constant 0 : i32
    return %c0_i32, %c0_i32_0 : i32, i32
  }
  func.func @transform_4(%arg0: i32) -> (i32, i32) {
    %c0_i32 = arith.constant 0 : i32
    %c0_i32_0 = arith.constant 0 : i32
    %c0_i32_1 = arith.constant 0 : i32
    return %c0_i32, %c0_i32_0 : i32, i32
  }
  func.func @transform_5(%arg0: i32) -> (i32, i32) {
    %c0_i32 = arith.constant 0 : i32
    %c0_i32_0 = arith.constant 0 : i32
    %c0_i32_1 = arith.constant 0 : i32
    return %c0_i32, %c0_i32_0 : i32, i32
  }
  func.func @transform_6(%arg0: i32) -> (i32, i32) {
    %c0_i32 = arith.constant 0 : i32
    %c0_i32_0 = arith.constant 0 : i32
    %c0_i32_1 = arith.constant 0 : i32
    return %c0_i32, %c0_i32_0 : i32, i32
  }
  func.func @transform_7(%arg0: i32) -> (i32, i32) {
    %c0_i32 = arith.constant 0 : i32
    %c0_i32_0 = arith.constant 0 : i32
    return %arg0, %c0_i32 : i32, i32
  }
}

</mosaic_0001>

<llo_original>
// kernel: _fused_encoder_2d.1
$region0: #{_fused_encoder_2d.1}
  #allocation0 [shape = 'u32[]', space=smem, size = 0x4, offset = 0x4, fixed_abs, tag = 'smem constant byte address 0x4 - core index']
  #allocation1 [shape = 'u32[144,128]{1,0:T(1,128)}', space=vmem, size = 0x12000, scoped, tag = 'internal scratch']
  %s0 = inlined_call_operand.hbm [shape: f32[128,128], index: 0, kind: input, shape index: {}]
  %s1 = inlined_call_operand.hbm [shape: bf16[128,256], index: 1, kind: input, shape index: {}]
  %s2 = inlined_call_operand.vmem [shape: f32[1,256], index: 2, kind: input, shape index: {}]
  %s3 = inlined_call_operand.hbm [shape: bf16[256,128], index: 3, kind: input, shape index: {}]
  %s4 = inlined_call_operand.vmem [shape: f32[1,128], index: 4, kind: input, shape index: {}]
  %s5 = inlined_call_operand.vmem [shape: f32[1,128], index: 5, kind: input, shape index: {}]
  %s6 = inlined_call_operand.vmem [shape: f32[1,128], index: 6, kind: input, shape index: {}]
  %s7 = inlined_call_operand.hbm [shape: f32[128,128], index: 7, kind: output, shape index: {}]
  %s8 = sld [smem:[#allocation0]]
  $region73: #{_fused_encoder_2d.1} parent=0
    _
  %s10 = ssub.s32 1, %s8
  %s11 = scalar_select 0, %s10, %s8
  $region1: #{_fused_encoder_2d.1} parent=0
    #allocation2 [shape = 'u8[65536]{0}', space=vmem, size = 0x10000, scoped, tag = 'input window, operand 0']
    #allocation3 [shape = 's32[2]{0}', space=sflag, size = 0x8, scoped, tag = 'scoped memory for _fused_encoder_2d.1']
    #allocation4 [shape = 's32[2]{0}', space=sflag, size = 0x8, scoped, tag = 'scoped memory for _fused_encoder_2d.1']
    #allocation5 [shape = 'u8[65536]{0}', space=vmem, size = 0x10000, scoped, tag = 'input window, operand 1, single buffered']
    #allocation6 [shape = 's32[1]{0}', space=sflag, size = 0x4, scoped, tag = 'scoped memory for _fused_encoder_2d.1']
    #allocation7 [shape = 'u8[65536]{0}', space=vmem, size = 0x10000, scoped, tag = 'input window, operand 3, single buffered']
    #allocation8 [shape = 'u8[65536]{0}', space=vmem, size = 0x10000, scoped, tag = 'output window, operand 0']
    %12 = vsyncpa [#allocation3], 0
    %s13 = scalar_lea.sflag [#allocation3], 1
    %14 = vsyncpa %s13, 0
    %15 = vsyncpa [#allocation6], 0
    %16 = vsyncpa [#allocation4], 0
    %s17 = scalar_lea.sflag [#allocation4], 1
    %18 = vsyncpa %s17, 0
    loop: start=0, step=1, limit=4
    $region2: #{_fused_encoder_2d.1} parent=1 // loop_pre_header
      _
    $region3: #{_fused_encoder_2d.1} parent=1 // loop_header
      %s20 = sphi 0, %s24
      %p21 = scmp.ge.s32.totalorder %s20, 4
      %s30 = sphi 0, %s32
      %s33 = sphi 0, %s30
      %s34 = sphi 0, %s33
      %s50 = sphi 0, %s34
      %s54 = sphi 0, %s54
      %s56 = sphi 0, %s54
      %s57 = sphi 0, %s56
      %s71 = sphi 0, %s57
      %s75 = sphi 0, %s75
      %s77 = sphi 0, %s75
      %s78 = sphi 0, %s77
      %s92 = sphi 0, %s78
      %s96 = sphi 0, %s96
      %s98 = sphi 0, %s96
      %s99 = sphi 0, %s98
      %s113 = sphi 0, %s99
      %s117 = sphi 0, %s117
      %s119 = sphi 0, %s117
      %s120 = sphi 0, %s119
      %s134 = sphi 0, %s120
      %s138 = sphi 0, %s138
      %s140 = sphi 0, %s138
      %s141 = sphi 0, %s140
      %s155 = sphi 0, %s141
      %s159 = sphi 0, %s159
      %s161 = sphi 0, %s159
      %s162 = sphi 0, %s161
      %s176 = sphi 0, %s162
      %s182 = sphi 0, %s184
      %s185 = sphi 0, %s182
      %s186 = sphi 0, %s185
      %s202 = sphi 0, %s186
    $region4: #{_fused_encoder_2d.1} parent=1 // loop_header_branch
      %23 = sbr.rel (%p21) target = $region8
    $region5: #{_fused_encoder_2d.1} parent=1 // loop_body
      %s25 = ssub.s32 %s20, 1
      %s26 = ssub.s32 %s20, 2
      %s27 = sadd.s32 %s20, 1
      %s28 = ssub.s32 %s20, %s27
      %p29 = scmp.eq.s32.totalorder %s28, 0
      %s31 = sadd.s32 %s30, 1
      %s32 = scalar_select %p29, %s30, %s31
      %p35 = pneg %p29
      %p36 = scmp.eq.s32.totalorder %s20, 1
      %p37 = por %p35, %p36
      %p38 = scmp.ne.s32.totalorder %s30, %s33
      %p39 = scmp.eq.s32.totalorder %s20, 0
      %p40 = por %p38, %p39
      %p41 = scmp.ne.s32.totalorder %s30, %s33
      %p42 = scmp.eq.s32.totalorder %s25, 1
      %p43 = por %p41, %p42
      %p44 = scmp.ne.s32.totalorder %s33, %s34
      %p45 = scmp.eq.s32.totalorder %s25, 0
      %p46 = por %p44, %p45
      %p47 = scmp.ne.s32.totalorder %s33, %s34
      %p48 = scmp.eq.s32.totalorder %s26, 1
      %p49 = por %p47, %p48
      %p51 = scmp.ne.s32.totalorder %s34, %s50
      %p52 = scmp.eq.s32.totalorder %s26, 0
      %p53 = por %p51, %p52
      %s55 = sadd.s32 %s54, 1
      %p58 = scmp.eq.s32.totalorder %s20, 1
      %p59 = scmp.ne.s32.totalorder %s54, %s56
      %p60 = scmp.eq.s32.totalorder %s20, 0
      %p61 = por %p59, %p60
      %p62 = scmp.ne.s32.totalorder %s54, %s56
      %p63 = scmp.eq.s32.totalorder %s25, 1
      %p64 = por %p62, %p63
      %p65 = scmp.ne.s32.totalorder %s56, %s57
      %p66 = scmp.eq.s32.totalorder %s25, 0
      %p67 = por %p65, %p66
      %p68 = scmp.ne.s32.totalorder %s56, %s57
      %p69 = scmp.eq.s32.totalorder %s26, 1
      %p70 = por %p68, %p69
      %p72 = scmp.ne.s32.totalorder %s57, %s71
      %p73 = scmp.eq.s32.totalorder %s26, 0
      %p74 = por %p72, %p73
      %s76 = sadd.s32 %s75, 1
      %p79 = scmp.eq.s32.totalorder %s20, 1
      %p80 = scmp.ne.s32.totalorder %s75, %s77
      %p81 = scmp.eq.s32.totalorder %s20, 0
      %p82 = por %p80, %p81
      %p83 = scmp.ne.s32.totalorder %s75, %s77
      %p84 = scmp.eq.s32.totalorder %s25, 1
      %p85 = por %p83, %p84
      %p86 = scmp.ne.s32.totalorder %s77, %s78
      %p87 = scmp.eq.s32.totalorder %s25, 0
      %p88 = por %p86, %p87
      %p89 = scmp.ne.s32.totalorder %s77, %s78
      %p90 = scmp.eq.s32.totalorder %s26, 1
      %p91 = por %p89, %p90
      %p93 = scmp.ne.s32.totalorder %s78, %s92
      %p94 = scmp.eq.s32.totalorder %s26, 0
      %p95 = por %p93, %p94
      %s97 = sadd.s32 %s96, 1
      %p100 = scmp.eq.s32.totalorder %s20, 1
      %p101 = scmp.ne.s32.totalorder %s96, %s98
      %p102 = scmp.eq.s32.totalorder %s20, 0
      %p103 = por %p101, %p102
      %p104 = scmp.ne.s32.totalorder %s96, %s98
      %p105 = scmp.eq.s32.totalorder %s25, 1
      %p106 = por %p104, %p105
      %p107 = scmp.ne.s32.totalorder %s98, %s99
      %p108 = scmp.eq.s32.totalorder %s25, 0
      %p109 = por %p107, %p108
      %p110 = scmp.ne.s32.totalorder %s98, %s99
      %p111 = scmp.eq.s32.totalorder %s26, 1
      %p112 = por %p110, %p111
      %p114 = scmp.ne.s32.totalorder %s99, %s113
      %p115 = scmp.eq.s32.totalorder %s26, 0
      %p116 = por %p114, %p115
      %s118 = sadd.s32 %s117, 1
      %p121 = scmp.eq.s32.totalorder %s20, 1
      %p122 = scmp.ne.s32.totalorder %s117, %s119
      %p123 = scmp.eq.s32.totalorder %s20, 0
      %p124 = por %p122, %p123
      %p125 = scmp.ne.s32.totalorder %s117, %s119
      %p126 = scmp.eq.s32.totalorder %s25, 1
      %p127 = por %p125, %p126
      %p128 = scmp.ne.s32.totalorder %s119, %s120
      %p129 = scmp.eq.s32.totalorder %s25, 0
      %p130 = por %p128, %p129
      %p131 = scmp.ne.s32.totalorder %s119, %s120
      %p132 = scmp.eq.s32.totalorder %s26, 1
      %p133 = por %p131, %p132
      %p135 = scmp.ne.s32.totalorder %s120, %s134
      %p136 = scmp.eq.s32.totalorder %s26, 0
      %p137 = por %p135, %p136
      %s139 = sadd.s32 %s138, 1
      %p142 = scmp.eq.s32.totalorder %s20, 1
      %p143 = scmp.ne.s32.totalorder %s138, %s140
      %p144 = scmp.eq.s32.totalorder %s20, 0
      %p145 = por %p143, %p144
      %p146 = scmp.ne.s32.totalorder %s138, %s140
      %p147 = scmp.eq.s32.totalorder %s25, 1
      %p148 = por %p146, %p147
      %p149 = scmp.ne.s32.totalorder %s140, %s141
      %p150 = scmp.eq.s32.totalorder %s25, 0
      %p151 = por %p149, %p150
      %p152 = scmp.ne.s32.totalorder %s140, %s141
      %p153 = scmp.eq.s32.totalorder %s26, 1
      %p154 = por %p152, %p153
      %p156 = scmp.ne.s32.totalorder %s141, %s155
      %p157 = scmp.eq.s32.totalorder %s26, 0
      %p158 = por %p156, %p157
      %s160 = sadd.s32 %s159, 1
      %p163 = scmp.eq.s32.totalorder %s20, 1
      %p164 = scmp.ne.s32.totalorder %s159, %s161
      %p165 = scmp.eq.s32.totalorder %s20, 0
      %p166 = por %p164, %p165
      %p167 = scmp.ne.s32.totalorder %s159, %s161
      %p168 = scmp.eq.s32.totalorder %s25, 1
      %p169 = por %p167, %p168
      %p170 = scmp.ne.s32.totalorder %s161, %s162
      %p171 = scmp.eq.s32.totalorder %s25, 0
      %p172 = por %p170, %p171
      %p173 = scmp.ne.s32.totalorder %s161, %s162
      %p174 = scmp.eq.s32.totalorder %s26, 1
      %p175 = por %p173, %p174
      %p177 = scmp.ne.s32.totalorder %s162, %s176
      %p178 = scmp.eq.s32.totalorder %s26, 0
      %p179 = por %p177, %p178
      %s180 = ssub.s32 %s20, %s27
      %p181 = scmp.eq.s32.totalorder %s180, 0
      %s183 = sadd.s32 %s182, 1
      %s184 = scalar_select %p181, %s182, %s183
      %p187 = pneg %p181
      %p188 = scmp.eq.s32.totalorder %s20, 1
      %p189 = por %p187, %p188
      %p190 = scmp.ne.s32.totalorder %s182, %s185
      %p191 = scmp.eq.s32.totalorder %s20, 0
      %p192 = por %p190, %p191
      %p193 = scmp.ne.s32.totalorder %s182, %s185
      %p194 = scmp.eq.s32.totalorder %s25, 1
      %p195 = por %p193, %p194
      %p196 = scmp.ne.s32.totalorder %s185, %s186
      %p197 = scmp.eq.s32.totalorder %s25, 0
      %p198 = por %p196, %p197
      %p199 = scmp.ne.s32.totalorder %s185, %s186
      %p200 = scmp.eq.s32.totalorder %s26, 1
      %p201 = por %p199, %p200
      %p203 = scmp.ne.s32.totalorder %s186, %s202
      %p204 = scmp.eq.s32.totalorder %s26, 0
      %p205 = por %p203, %p204
      %p206 = scmp.le.s32.totalorder 1, %s20
      %p207 = scmp.lt.s32.totalorder %s20, 3
      %p208 = pnand %p206, %p207
      %p209 = pneg %p208
      // Predicated region
      $region9: #{_fused_encoder_2d.1} parent=5 // pred_check
        _
      $region10: #{_fused_encoder_2d.1} parent=5 // pred_check_branch
        %211 = sbr.rel (%p208) target = $region12
      $region11: #{_fused_encoder_2d.1} parent=5 // pred_region
        %s212 = ssub.s32 %s20, 1
        // Predicated region
        $region13: #{_fused_encoder_2d.1} parent=11 // pred_check
          %p213 = pneg %p67
        $region14: #{_fused_encoder_2d.1} parent=11 // pred_check_branch
          %215 = sbr.rel (%p213) target = $region16
        $region15: #{_fused_encoder_2d.1} parent=11 // pred_region
          %s217 = ssub.s32 2048, 2048
          %218 = vsyncadd [#allocation6], %s217
          %s219 = sshll.u32 [#allocation5], 4
          %s220 = int_to_ptr.vmem [resolvable:$true] %s219
          %225 = dma.hbm_to_vmem [thread:$0]  %s1, 2048, %s220, [#allocation6], 128, 128, 8
        $region16: #{_fused_encoder_2d.1} parent=11 // pred_fallthru
          _
        // Predicated region
        $region17: #{_fused_encoder_2d.1} parent=11 // pred_check
          %p226 = pneg %p88
        $region18: #{_fused_encoder_2d.1} parent=11 // pred_check_branch
          %228 = sbr.rel (%p226) target = $region20
        $region19: #{_fused_encoder_2d.1} parent=11 // pred_region
          _
        $region20: #{_fused_encoder_2d.1} parent=11 // pred_fallthru
          _
        // Predicated region
        $region21: #{_fused_encoder_2d.1} parent=11 // pred_check
          %p229 = pneg %p109
        $region22: #{_fused_encoder_2d.1} parent=11 // pred_check_branch
          %231 = sbr.rel (%p229) target = $region24
        $region23: #{_fused_encoder_2d.1} parent=11 // pred_region
          %s233 = ssub.s32 2048, 2048
          %234 = vsyncadd [#allocation6], %s233
          %s235 = sshll.u32 [#allocation7], 4
          %s236 = int_to_ptr.vmem [resolvable:$true] %s235
          %241 = dma.hbm_to_vmem [thread:$0]  %s3, 2048, %s236, [#allocation6], 64, 64, 4
        $region24: #{_fused_encoder_2d.1} parent=11 // pred_fallthru
          _
        // Predicated region
        $region25: #{_fused_encoder_2d.1} parent=11 // pred_check
          %p242 = pneg %p130
        $region26: #{_fused_encoder_2d.1} parent=11 // pred_check_branch
          %244 = sbr.rel (%p242) target = $region28
        $region27: #{_fused_encoder_2d.1} parent=11 // pred_region
          _
        $region28: #{_fused_encoder_2d.1} parent=11 // pred_fallthru
          _
        // Predicated region
        $region29: #{_fused_encoder_2d.1} parent=11 // pred_check
          %p245 = pneg %p151
        $region30: #{_fused_encoder_2d.1} parent=11 // pred_check_branch
          %247 = sbr.rel (%p245) target = $region32
        $region31: #{_fused_encoder_2d.1} parent=11 // pred_region
          _
        $region32: #{_fused_encoder_2d.1} parent=11 // pred_fallthru
          _
        // Predicated region
        $region33: #{_fused_encoder_2d.1} parent=11 // pred_check
          %p248 = pneg %p172
        $region34: #{_fused_encoder_2d.1} parent=11 // pred_check_branch
          %250 = sbr.rel (%p248) target = $region36
        $region35: #{_fused_encoder_2d.1} parent=11 // pred_region
          _
        $region36: #{_fused_encoder_2d.1} parent=11 // pred_fallthru
          _
      $region12: #{_fused_encoder_2d.1} parent=5 // pred_fallthru
        _
      %p251 = scmp.lt.s32.totalorder %s20, 2
      // Predicated region
      $region37: #{_fused_encoder_2d.1} parent=5 // pred_check
        %p252 = pneg %p251
      $region38: #{_fused_encoder_2d.1} parent=5 // pred_check_branch
        %254 = sbr.rel (%p252) target = $region40
      $region39: #{_fused_encoder_2d.1} parent=5 // pred_region
        // Predicated region
        $region41: #{_fused_encoder_2d.1} parent=39 // pred_check
          %p255 = pneg %p40
        $region42: #{_fused_encoder_2d.1} parent=39 // pred_check_branch
          %257 = sbr.rel (%p255) target = $region44
        $region43: #{_fused_encoder_2d.1} parent=39 // pred_region
          %s258 = sand.u32 %s30, 1
          %s259 = scalar_lea.sflag [#allocation3], %s258
          %s260 = sand.u32 %s30, 1
          %s261 = smul.addr %s260, 64
          %s262 = scalar_lea.vmem [#allocation2], %s261
          %s263 = smul.u32 8, %s20
          %s265 = ssub.s32 1024, 1024
          %266 = vsyncadd %s259, %s265
          %s267 = smul.addr %s263, 128
          %s268 = scalar_lea.hbm %s0, %s267
          %s269 = sshll.u32 %s262, 4
          %s270 = int_to_ptr.vmem [resolvable:$true] %s269
          %275 = dma.hbm_to_vmem [thread:$0]  %s268, 1024, %s270, %s259, 128, 128, 8
        $region44: #{_fused_encoder_2d.1} parent=39 // pred_fallthru
          _
      $region40: #{_fused_encoder_2d.1} parent=5 // pred_fallthru
        _
      %p276 = scmp.le.s32.totalorder 1, %s20
      %p277 = scmp.lt.s32.totalorder %s20, 3
      %p278 = pnand %p276, %p277
      %p279 = pneg %p278
      // Predicated region
      $region45: #{_fused_encoder_2d.1} parent=5 // pred_check
        _
      $region46: #{_fused_encoder_2d.1} parent=5 // pred_check_branch
        %281 = sbr.rel (%p278) target = $region48
      $region47: #{_fused_encoder_2d.1} parent=5 // pred_region
        %s282 = ssub.s32 %s20, 1
        %s283 = sand.u32 %s33, 1
        %s284 = scalar_lea.sflag [#allocation3], %s283
        %s285 = sand.u32 %s33, 1
        %s286 = smul.addr %s285, 64
        %s287 = scalar_lea.vmem [#allocation2], %s286
        // Predicated region
        $region49: #{_fused_encoder_2d.1} parent=47 // pred_check
          %p288 = pneg %p46
        $region50: #{_fused_encoder_2d.1} parent=47 // pred_check_branch
          %290 = sbr.rel (%p288) target = $region52
        $region51: #{_fused_encoder_2d.1} parent=47 // pred_region
          %291 = dma.done %s284, 1024
        $region52: #{_fused_encoder_2d.1} parent=47 // pred_fallthru
          _
        // Predicated region
        $region53: #{_fused_encoder_2d.1} parent=47 // pred_check
          %p292 = pneg %p67
        $region54: #{_fused_encoder_2d.1} parent=47 // pred_check_branch
          %294 = sbr.rel (%p292) target = $region56
        $region55: #{_fused_encoder_2d.1} parent=47 // pred_region
          %295 = dma.done [#allocation6], 2048
        $region56: #{_fused_encoder_2d.1} parent=47 // pred_fallthru
          _
        // Predicated region
        $region57: #{_fused_encoder_2d.1} parent=47 // pred_check
          %p296 = pneg %p109
        $region58: #{_fused_encoder_2d.1} parent=47 // pred_check_branch
          %298 = sbr.rel (%p296) target = $region60
        $region59: #{_fused_encoder_2d.1} parent=47 // pred_region
          %299 = dma.done [#allocation6], 2048
        $region60: #{_fused_encoder_2d.1} parent=47 // pred_fallthru
          _
        %s300 = sand.u32 %s33, 1
        %s301 = scalar_lea.sflag [#allocation3], %s300
        %s302 = sand.u32 %s33, 1
        %s303 = smul.addr %s302, 64
        %s304 = scalar_lea.vmem [#allocation2], %s303
        %p305 = pneg %p46
        %p306 = pneg %p43
        %p307 = pneg %p67
        %p308 = pneg %p64
        %p309 = pneg %p88
        %p310 = pneg %p85
        %p311 = pneg %p109
        %p312 = pneg %p106
        %p313 = pneg %p130
        %p314 = pneg %p127
        %p315 = pneg %p151
        %p316 = pneg %p148
        %p317 = pneg %p172
        %p318 = pneg %p169
        %p319 = pneg %p198
        %p320 = pneg %p195
        %s321 = sand.u32 %s185, 1
        %s322 = scalar_lea.sflag [#allocation4], %s321
        %s323 = sand.u32 %s185, 1
        %s324 = smul.addr %s323, 64
        %s325 = scalar_lea.vmem [#allocation8], %s324
        %s326 = smul.u32 8, %s25
        %s327 = smul.u32 8, %s25
        %v329 = vld [vmem:[%s287] sm:$0xff]
        %v330 = vld [vmem:[%s287 + $0x8] sm:$0xff]
        %v331 = vld [vmem:[%s287 + $0x10] sm:$0xff]
        %v332 = vld [vmem:[%s287 + $0x18] sm:$0xff]
        %v333 = vld [vmem:[%s287 + $0x20] sm:$0xff]
        %v334 = vld [vmem:[%s287 + $0x28] sm:$0xff]
        %v335 = vld [vmem:[%s287 + $0x30] sm:$0xff]
        %v336 = vld [vmem:[%s287 + $0x38] sm:$0xff]
        %v337 = vld [vmem:[#allocation5] sm:$0xff]
        %v338 = vld [vmem:[#allocation5 + $0x8] sm:$0xff]
        %v339 = vld [vmem:[#allocation5 + $0x10] sm:$0xff]
        %v340 = vld [vmem:[#allocation5 + $0x18] sm:$0xff]
        %v341 = vld [vmem:[#allocation5 + $0x20] sm:$0xff]
        %v342 = vld [vmem:[#allocation5 + $0x28] sm:$0xff]
        %v343 = vld [vmem:[#allocation5 + $0x30] sm:$0xff]
        %v344 = vld [vmem:[#allocation5 + $0x38] sm:$0xff]
        %v345 = vld [vmem:[#allocation5 + $0x40] sm:$0xff]
        %v346 = vld [vmem:[#allocation5 + $0x48] sm:$0xff]
        %v347 = vld [vmem:[#allocation5 + $0x50] sm:$0xff]
        %v348 = vld [vmem:[#allocation5 + $0x58] sm:$0xff]
        %v349 = vld [vmem:[#allocation5 + $0x60] sm:$0xff]
        %v350 = vld [vmem:[#allocation5 + $0x68] sm:$0xff]
        %v351 = vld [vmem:[#allocation5 + $0x70] sm:$0xff]
        %v352 = vld [vmem:[#allocation5 + $0x78] sm:$0xff]
        %v353 = vld [vmem:[#allocation7] sm:$0xf]
        %v354 = vld [vmem:[#allocation7 + $0x4] sm:$0xf]
        %v355 = vld [vmem:[#allocation7 + $0x8] sm:$0xf]
        %v356 = vld [vmem:[#allocation7 + $0xc] sm:$0xf]
        %v357 = vld [vmem:[#allocation7 + $0x10] sm:$0xf]
        %v358 = vld [vmem:[#allocation7 + $0x14] sm:$0xf]
        %v359 = vld [vmem:[#allocation7 + $0x18] sm:$0xf]
        %v360 = vld [vmem:[#allocation7 + $0x1c] sm:$0xf]
        %v361 = vld [vmem:[#allocation7 + $0x20] sm:$0xf]
        %v362 = vld [vmem:[#allocation7 + $0x24] sm:$0xf]
        %v363 = vld [vmem:[#allocation7 + $0x28] sm:$0xf]
        %v364 = vld [vmem:[#allocation7 + $0x2c] sm:$0xf]
        %v365 = vld [vmem:[#allocation7 + $0x30] sm:$0xf]
        %v366 = vld [vmem:[#allocation7 + $0x34] sm:$0xf]
        %v367 = vld [vmem:[#allocation7 + $0x38] sm:$0xf]
        %v368 = vld [vmem:[#allocation7 + $0x3c] sm:$0xf]
        %v369 = vld [vmem:[#allocation7 + $0x40] sm:$0xf]
        %v370 = vld [vmem:[#allocation7 + $0x44] sm:$0xf]
        %v371 = vld [vmem:[#allocation7 + $0x48] sm:$0xf]
        %v372 = vld [vmem:[#allocation7 + $0x4c] sm:$0xf]
        %v373 = vld [vmem:[#allocation7 + $0x50] sm:$0xf]
        %v374 = vld [vmem:[#allocation7 + $0x54] sm:$0xf]
        %v375 = vld [vmem:[#allocation7 + $0x58] sm:$0xf]
        %v376 = vld [vmem:[#allocation7 + $0x5c] sm:$0xf]
        %v377 = vld [vmem:[#allocation7 + $0x60] sm:$0xf]
        %v378 = vld [vmem:[#allocation7 + $0x64] sm:$0xf]
        %v379 = vld [vmem:[#allocation7 + $0x68] sm:$0xf]
        %v380 = vld [vmem:[#allocation7 + $0x6c] sm:$0xf]
        %v381 = vld [vmem:[#allocation7 + $0x70] sm:$0xf]
        %v382 = vld [vmem:[#allocation7 + $0x74] sm:$0xf]
        %v383 = vld [vmem:[#allocation7 + $0x78] sm:$0xf]
        %v384 = vld [vmem:[#allocation7 + $0x7c] sm:$0xf]
        %v385 = vld [vmem:[%s2] sm:$0x3]
        %v386 = vld [vmem:[%s4] sm:$0x1]
        %v387 = vld [vmem:[%s5] sm:$0x1]
        %v388 = vld [vmem:[%s6] sm:$0x1]
        %v389 = vpack.c.bf16 %v330, %v329
        %v390 = vpack.c.bf16 %v332, %v331
        %v391 = vpack.c.bf16 %v334, %v333
        %v392 = vpack.c.bf16 %v336, %v335
        %v394 = vlaneseq
        %v395 = vshrl.u32 %v394, 7
        %v396 = vsub.s32 0, %v395
        %v397 = vrot.slane %v385, %v396
        %v398 = vlaneseq
        %v399 = vshrl.u32 %v398, 7
        %v400 = vsub.s32 1, %v399
        %v401 = vrot.slane %v385, %v400
        %v420 = vunpack.c.l.b16 %v337
        %v421 = vunpack.c.h.b16 %v337
        %v422 = vunpack.c.l.b16 %v338
        %v423 = vunpack.c.h.b16 %v338
        %v424 = vunpack.c.l.b16 %v339
        %v425 = vunpack.c.h.b16 %v339
        %v426 = vunpack.c.l.b16 %v340
        %v427 = vunpack.c.h.b16 %v340
        %v428 = vunpack.c.l.b16 %v341
        %v429 = vunpack.c.h.b16 %v341
        %v430 = vunpack.c.l.b16 %v342
        %v431 = vunpack.c.h.b16 %v342
        %v432 = vunpack.c.l.b16 %v343
        %v433 = vunpack.c.h.b16 %v343
        %v434 = vunpack.c.l.b16 %v344
        %v435 = vunpack.c.h.b16 %v344
        %v436 = vunpack.c.l.b16 %v345
        %v437 = vunpack.c.h.b16 %v345
        %v438 = vunpack.c.l.b16 %v346
        %v439 = vunpack.c.h.b16 %v346
        %v440 = vunpack.c.l.b16 %v347
        %v441 = vunpack.c.h.b16 %v347
        %v442 = vunpack.c.l.b16 %v348
        %v443 = vunpack.c.h.b16 %v348
        %v444 = vunpack.c.l.b16 %v349
        %v445 = vunpack.c.h.b16 %v349
        %v446 = vunpack.c.l.b16 %v350
        %v447 = vunpack.c.h.b16 %v350
        %v448 = vunpack.c.l.b16 %v351
        %v449 = vunpack.c.h.b16 %v351
        %v450 = vunpack.c.l.b16 %v352
        %v451 = vunpack.c.h.b16 %v352
        %v452 = vpack.c.b16 %v422, %v420
        %v453 = vpack.c.b16 %v423, %v421
        %v454 = vpack.c.b16 %v426, %v424
        %v455 = vpack.c.b16 %v427, %v425
        %v456 = vpack.c.b16 %v430, %v428
        %v457 = vpack.c.b16 %v431, %v429
        %v458 = vpack.c.b16 %v434, %v432
        %v459 = vpack.c.b16 %v435, %v433
        %v460 = vpack.c.b16 %v438, %v436
        %v461 = vpack.c.b16 %v439, %v437
        %v462 = vpack.c.b16 %v442, %v440
        %v463 = vpack.c.b16 %v443, %v441
        %v464 = vpack.c.b16 %v446, %v444
        %v465 = vpack.c.b16 %v447, %v445
        %v466 = vpack.c.b16 %v450, %v448
        %v467 = vpack.c.b16 %v451, %v449
        %484 = vmatprep.subr.bf16.mxu0 %v467
        %485 = vmatpush1.bf16.msra.mxu0 %v466
        %486 = vmatprep.subr.bf16.mxu0 %v465
        %487 = vmatpush1.bf16.msra.mxu0 %v464
        %488 = vmatprep.subr.bf16.mxu0 %v463
        %489 = vmatpush1.bf16.msra.mxu0 %v462
        %490 = vmatprep.subr.bf16.mxu0 %v461
        %491 = vmatpush1.bf16.msra.mxu0 %v460
        %492 = vmatprep.subr.bf16.mxu0 %v459
        %493 = vmatpush1.bf16.msra.mxu0 %v458
        %494 = vmatprep.subr.bf16.mxu0 %v457
        %495 = vmatpush1.bf16.msra.mxu0 %v456
        %496 = vmatprep.subr.bf16.mxu0 %v455
        %497 = vmatpush1.bf16.msra.mxu0 %v454
        %498 = vmatprep.subr.bf16.mxu0 %v453
        %499 = vmatpush1.bf16.msra.mxu0 %v452
        %500 = vmatprep.subr.bf16.mxu0 0
        %501 = vmatpush2.bf16.msra.mxu0 0
        %502 = vmatprep.subr.bf16.mxu0 0
        %503 = vmatpush2.bf16.msra.mxu0 0
        %504 = vmatprep.subr.bf16.mxu0 0
        %505 = vmatpush2.bf16.msra.mxu0 0
        %506 = vmatprep.subr.bf16.mxu0 0
        %507 = vmatpush2.bf16.msra.mxu0 0
        %508 = vmatprep.subr.bf16.mxu0 0
        %509 = vmatpush2.bf16.msra.mxu0 0
        %510 = vmatprep.subr.bf16.mxu0 0
        %511 = vmatpush2.bf16.msra.mxu0 0
        %512 = vmatprep.subr.bf16.mxu0 0
        %513 = vmatpush2.bf16.msra.mxu0 0
        %514 = vmatprep.subr.bf16.mxu0 0
        %515 = vmatpush2.bf16.msra.mxu0 0
        %516 = vmatprep.mubr.bf16.mxu0 0
        %517 = vmatmul.mubr.bf16.gmra.mxu0 %v389
        %v518 = vpop.f32.mrf.mxu0
        %v519 = vadd.f32 %v397, %v518
        %v520 = vpop.f32.mrf.mxu0
        %v521 = vadd.f32 %v401, %v520
        %v522 = vpop.f32.mrf.mxu0
        %v523 = vadd.f32 %v397, %v522
        %v524 = vpop.f32.mrf.mxu0
        %v525 = vadd.f32 %v401, %v524
        %526 = vmatprep.mubr.bf16.mxu0 0
        %527 = vmatmul.mubr.bf16.gmra.mxu0 %v390
        %v528 = vpop.f32.mrf.mxu0
        %v529 = vadd.f32 %v397, %v528
        %v530 = vpop.f32.mrf.mxu0
        %v531 = vadd.f32 %v401, %v530
        %v532 = vpop.f32.mrf.mxu0
        %v533 = vadd.f32 %v397, %v532
        %v534 = vpop.f32.mrf.mxu0
        %v535 = vadd.f32 %v401, %v534
        %536 = vmatprep.mubr.bf16.mxu0 0
        %537 = vmatmul.mubr.bf16.gmra.mxu0 %v391
        %v538 = vpop.f32.mrf.mxu0
        %v539 = vadd.f32 %v397, %v538
        %v540 = vpop.f32.mrf.mxu0
        %v541 = vadd.f32 %v401, %v540
        %v542 = vpop.f32.mrf.mxu0
        %v543 = vadd.f32 %v397, %v542
        %v544 = vpop.f32.mrf.mxu0
        %v545 = vadd.f32 %v401, %v544
        %546 = vmatprep.mubr.bf16.mxu0 0
        %547 = vmatmul.mubr.bf16.gmra.mxu0 %v392
        %v548 = vpop.f32.mrf.mxu0
        %v549 = vadd.f32 %v397, %v548
        %v550 = vpop.f32.mrf.mxu0
        %v551 = vadd.f32 %v401, %v550
        %v552 = vpop.f32.mrf.mxu0
        %v553 = vadd.f32 %v397, %v552
        %v554 = vpop.f32.mrf.mxu0
        %v555 = vadd.f32 %v401, %v554
        %556 = vdwg.mxu0
        %v557 = vmax.f32 %v519, 0.0
        %v558 = vmax.f32 %v521, 0.0
        %v559 = vmax.f32 %v523, 0.0
        %v560 = vmax.f32 %v525, 0.0
        %v561 = vmax.f32 %v529, 0.0
        %v562 = vmax.f32 %v531, 0.0
        %v563 = vmax.f32 %v533, 0.0
        %v564 = vmax.f32 %v535, 0.0
        %v565 = vmax.f32 %v539, 0.0
        %v566 = vmax.f32 %v541, 0.0
        %v567 = vmax.f32 %v543, 0.0
        %v568 = vmax.f32 %v545, 0.0
        %v569 = vmax.f32 %v549, 0.0
        %v570 = vmax.f32 %v551, 0.0
        %v571 = vmax.f32 %v553, 0.0
        %v572 = vmax.f32 %v555, 0.0
        %v573 = vpack.c.bf16 %v559, %v557
        %v574 = vpack.c.bf16 %v560, %v558
        %v575 = vpack.c.bf16 %v563, %v561
        %v576 = vpack.c.bf16 %v564, %v562
        %v577 = vpack.c.bf16 %v567, %v565
        %v578 = vpack.c.bf16 %v568, %v566
        %v579 = vpack.c.bf16 %v571, %v569
        %v580 = vpack.c.bf16 %v572, %v570
        %v582 = vlaneseq
        %v583 = vshrl.u32 %v582, 7
        %v584 = vsub.s32 0, %v583
        %v585 = vrot.slane %v386, %v584
        %v619 = vunpack.c.l.b16 %v353
        %v620 = vunpack.c.l.b16 %v354
        %v621 = vunpack.c.l.b16 %v355
        %v622 = vunpack.c.l.b16 %v356
        %v623 = vunpack.c.l.b16 %v357
        %v624 = vunpack.c.l.b16 %v358
        %v625 = vunpack.c.l.b16 %v359
        %v626 = vunpack.c.l.b16 %v360
        %v627 = vunpack.c.l.b16 %v361
        %v628 = vunpack.c.l.b16 %v362
        %v629 = vunpack.c.l.b16 %v363
        %v630 = vunpack.c.l.b16 %v364
        %v631 = vunpack.c.l.b16 %v365
        %v632 = vunpack.c.l.b16 %v366
        %v633 = vunpack.c.l.b16 %v367
        %v634 = vunpack.c.l.b16 %v368
        %v635 = vunpack.c.l.b16 %v369
        %v636 = vunpack.c.l.b16 %v370
        %v637 = vunpack.c.l.b16 %v371
        %v638 = vunpack.c.l.b16 %v372
        %v639 = vunpack.c.l.b16 %v373
        %v640 = vunpack.c.l.b16 %v374
        %v641 = vunpack.c.l.b16 %v375
        %v642 = vunpack.c.l.b16 %v376
        %v643 = vunpack.c.l.b16 %v377
        %v644 = vunpack.c.l.b16 %v378
        %v645 = vunpack.c.l.b16 %v379
        %v646 = vunpack.c.l.b16 %v380
        %v647 = vunpack.c.l.b16 %v381
        %v648 = vunpack.c.l.b16 %v382
        %v649 = vunpack.c.l.b16 %v383
        %v650 = vunpack.c.l.b16 %v384
        %v651 = vpack.c.b16 %v620, %v619
        %v652 = vpack.c.b16 %v622, %v621
        %v653 = vpack.c.b16 %v624, %v623
        %v654 = vpack.c.b16 %v626, %v625
        %v655 = vpack.c.b16 %v628, %v627
        %v656 = vpack.c.b16 %v630, %v629
        %v657 = vpack.c.b16 %v632, %v631
        %v658 = vpack.c.b16 %v634, %v633
        %v659 = vpack.c.b16 %v636, %v635
        %v660 = vpack.c.b16 %v638, %v637
        %v661 = vpack.c.b16 %v640, %v639
        %v662 = vpack.c.b16 %v642, %v641
        %v663 = vpack.c.b16 %v644, %v643
        %v664 = vpack.c.b16 %v646, %v645
        %v665 = vpack.c.b16 %v648, %v647
        %v666 = vpack.c.b16 %v650, %v649
        %683 = vmatprep.subr.bf16.mxu0 0
        %684 = vmatpush1.bf16.msra.mxu0 %v658
        %685 = vmatprep.subr.bf16.mxu0 0
        %686 = vmatpush1.bf16.msra.mxu0 %v657
        %687 = vmatprep.subr.bf16.mxu0 0
        %688 = vmatpush1.bf16.msra.mxu0 %v656
        %689 = vmatprep.subr.bf16.mxu0 0
        %690 = vmatpush1.bf16.msra.mxu0 %v655
        %691 = vmatprep.subr.bf16.mxu0 0
        %692 = vmatpush1.bf16.msra.mxu0 %v654
        %693 = vmatprep.subr.bf16.mxu0 0
        %694 = vmatpush1.bf16.msra.mxu0 %v653
        %695 = vmatprep.subr.bf16.mxu0 0
        %696 = vmatpush1.bf16.msra.mxu0 %v652
        %697 = vmatprep.subr.bf16.mxu0 0
        %698 = vmatpush1.bf16.msra.mxu0 %v651
        %699 = vmatprep.subr.bf16.mxu0 0
        %700 = vmatpush2.bf16.msra.mxu0 %v666
        %701 = vmatprep.subr.bf16.mxu0 0
        %702 = vmatpush2.bf16.msra.mxu0 %v665
        %703 = vmatprep.subr.bf16.mxu0 0
        %704 = vmatpush2.bf16.msra.mxu0 %v664
        %705 = vmatprep.subr.bf16.mxu0 0
        %706 = vmatpush2.bf16.msra.mxu0 %v663
        %707 = vmatprep.subr.bf16.mxu0 0
        %708 = vmatpush2.bf16.msra.mxu0 %v662
        %709 = vmatprep.subr.bf16.mxu0 0
        %710 = vmatpush2.bf16.msra.mxu0 %v661
        %711 = vmatprep.subr.bf16.mxu0 0
        %712 = vmatpush2.bf16.msra.mxu0 %v660
        %713 = vmatprep.subr.bf16.mxu0 0
        %714 = vmatpush2.bf16.msra.mxu0 %v659
        %715 = vmatprep.mubr.bf16.mxu0 %v574
        %716 = vmatmul.mubr.bf16.gmra.mxu0 %v573
        %v717 = vpop.f32.mrf.mxu0
        %v718 = vadd.f32 %v585, %v717
        %v719 = vpop.f32.mrf.mxu0
        %v720 = vpop.f32.mrf.mxu0
        %v721 = vadd.f32 %v585, %v720
        %v722 = vpop.f32.mrf.mxu0
        %723 = vmatprep.mubr.bf16.mxu0 %v576
        %724 = vmatmul.mubr.bf16.gmra.mxu0 %v575
        %v725 = vpop.f32.mrf.mxu0
        %v726 = vadd.f32 %v585, %v725
        %v727 = vpop.f32.mrf.mxu0
        %v728 = vpop.f32.mrf.mxu0
        %v729 = vadd.f32 %v585, %v728
        %v730 = vpop.f32.mrf.mxu0
        %731 = vmatprep.mubr.bf16.mxu0 %v578
        %732 = vmatmul.mubr.bf16.gmra.mxu0 %v577
        %v733 = vpop.f32.mrf.mxu0
        %v734 = vadd.f32 %v585, %v733
        %v735 = vpop.f32.mrf.mxu0
        %v736 = vpop.f32.mrf.mxu0
        %v737 = vadd.f32 %v585, %v736
        %v738 = vpop.f32.mrf.mxu0
        %739 = vmatprep.mubr.bf16.mxu0 %v580
        %740 = vmatmul.mubr.bf16.gmra.mxu0 %v579
        %v741 = vpop.f32.mrf.mxu0
        %v742 = vadd.f32 %v585, %v741
        %v743 = vpop.f32.mrf.mxu0
        %v744 = vpop.f32.mrf.mxu0
        %v745 = vadd.f32 %v585, %v744
        %v746 = vpop.f32.mrf.mxu0
        %747 = vdwg.mxu0
        %v748 = vadd.f32 %v329, %v718
        %v749 = vadd.f32 %v330, %v721
        %v750 = vadd.f32 %v331, %v726
        %v751 = vadd.f32 %v332, %v729
        %v752 = vadd.f32 %v333, %v734
        %v753 = vadd.f32 %v334, %v737
        %v754 = vadd.f32 %v335, %v742
        %v755 = vadd.f32 %v336, %v745
        %756 = vadd.xlane.f32.xlu0 %v748
        %v757 = vpop.xlane.xlu0 %756
        %758 = vadd.xlane.f32.xlu0 %v749
        %v759 = vpop.xlane.xlu0 %758
        %760 = vadd.xlane.f32.xlu0 %v750
        %v761 = vpop.xlane.xlu0 %760
        %762 = vadd.xlane.f32.xlu0 %v751
        %v763 = vpop.xlane.xlu0 %762
        %764 = vadd.xlane.f32.xlu0 %v752
        %v765 = vpop.xlane.xlu0 %764
        %766 = vadd.xlane.f32.xlu0 %v753
        %v767 = vpop.xlane.xlu0 %766
        %768 = vadd.xlane.f32.xlu0 %v754
        %v769 = vpop.xlane.xlu0 %768
        %770 = vadd.xlane.f32.xlu0 %v755
        %v771 = vpop.xlane.xlu0 %770
        %v772 = vrcp.pop 128.0
        %v773 = vmul.f32 %v757, %v772
        %v774 = vmul.f32 %v759, %v772
        %v775 = vmul.f32 %v761, %v772
        %v776 = vmul.f32 %v763, %v772
        %v777 = vmul.f32 %v765, %v772
        %v778 = vmul.f32 %v767, %v772
        %v779 = vmul.f32 %v769, %v772
        %v780 = vmul.f32 %v771, %v772
        %v781 = vsub.f32 %v748, %v773
        %v782 = vsub.f32 %v749, %v774
        %v783 = vsub.f32 %v750, %v775
        %v784 = vsub.f32 %v751, %v776
        %v785 = vsub.f32 %v752, %v777
        %v786 = vsub.f32 %v753, %v778
        %v787 = vsub.f32 %v754, %v779
        %v788 = vsub.f32 %v755, %v780
        %v789 = vmul.f32 %v781, %v781
        %v790 = vmul.f32 %v782, %v782
        %v791 = vmul.f32 %v783, %v783
        %v792 = vmul.f32 %v784, %v784
        %v793 = vmul.f32 %v785, %v785
        %v794 = vmul.f32 %v786, %v786
        %v795 = vmul.f32 %v787, %v787
        %v796 = vmul.f32 %v788, %v788
        %797 = vadd.xlane.f32.xlu0 %v789
        %v798 = vpop.xlane.xlu0 %797
        %799 = vadd.xlane.f32.xlu0 %v790
        %v800 = vpop.xlane.xlu0 %799
        %801 = vadd.xlane.f32.xlu0 %v791
        %v802 = vpop.xlane.xlu0 %801
        %803 = vadd.xlane.f32.xlu0 %v792
        %v804 = vpop.xlane.xlu0 %803
        %805 = vadd.xlane.f32.xlu0 %v793
        %v806 = vpop.xlane.xlu0 %805
        %807 = vadd.xlane.f32.xlu0 %v794
        %v808 = vpop.xlane.xlu0 %807
        %809 = vadd.xlane.f32.xlu0 %v795
        %v810 = vpop.xlane.xlu0 %809
        %811 = vadd.xlane.f32.xlu0 %v796
        %v812 = vpop.xlane.xlu0 %811
        %v813 = vmul.f32 %v798, %v772
        %v814 = vmul.f32 %v800, %v772
        %v815 = vmul.f32 %v802, %v772
        %v816 = vmul.f32 %v804, %v772
        %v817 = vmul.f32 %v806, %v772
        %v818 = vmul.f32 %v808, %v772
        %v819 = vmul.f32 %v810, %v772
        %v820 = vmul.f32 %v812, %v772
        %v821 = vadd.f32 %v813, 1e-05
        %v822 = vadd.f32 %v814, 1e-05
        %v823 = vadd.f32 %v815, 1e-05
        %v824 = vadd.f32 %v816, 1e-05
        %v825 = vadd.f32 %v817, 1e-05
        %v826 = vadd.f32 %v818, 1e-05
        %v827 = vadd.f32 %v819, 1e-05
        %v828 = vadd.f32 %v820, 1e-05
        %v829 = vrsqrt.pop %v821
        %v830 = vrsqrt.pop %v822
        %v831 = vrsqrt.pop %v823
        %v832 = vrsqrt.pop %v824
        %v833 = vrsqrt.pop %v825
        %v834 = vrsqrt.pop %v826
        %v835 = vrsqrt.pop %v827
        %v836 = vrsqrt.pop %v828
        %v837 = vmul.f32 %v781, %v829
        %v838 = vmul.f32 %v782, %v830
        %v839 = vmul.f32 %v783, %v831
        %v840 = vmul.f32 %v784, %v832
        %v841 = vmul.f32 %v785, %v833
        %v842 = vmul.f32 %v786, %v834
        %v843 = vmul.f32 %v787, %v835
        %v844 = vmul.f32 %v788, %v836
        %v846 = vlaneseq
        %v847 = vshrl.u32 %v846, 7
        %v848 = vsub.s32 0, %v847
        %v849 = vrot.slane %v387, %v848
        %v851 = vmul.f32 %v837, %v849
        %v852 = vmul.f32 %v838, %v849
        %v853 = vmul.f32 %v839, %v849
        %v854 = vmul.f32 %v840, %v849
        %v855 = vmul.f32 %v841, %v849
        %v856 = vmul.f32 %v842, %v849
        %v857 = vmul.f32 %v843, %v849
        %v858 = vmul.f32 %v844, %v849
        %v860 = vlaneseq
        %v861 = vshrl.u32 %v860, 7
        %v862 = vsub.s32 0, %v861
        %v863 = vrot.slane %v388, %v862
        %v865 = vadd.f32 %v851, %v863
        %v866 = vadd.f32 %v852, %v863
        %v867 = vadd.f32 %v853, %v863
        %v868 = vadd.f32 %v854, %v863
        %v869 = vadd.f32 %v855, %v863
        %v870 = vadd.f32 %v856, %v863
        %v871 = vadd.f32 %v857, %v863
        %v872 = vadd.f32 %v858, %v863
        %v873 = vpack.c.bf16 %v866, %v865
        %v874 = vpack.c.bf16 %v868, %v867
        %v875 = vpack.c.bf16 %v870, %v869
        %v876 = vpack.c.bf16 %v872, %v871
        %877 = vmatprep.subr.bf16.mxu0 %v467
        %878 = vmatpush1.bf16.msra.mxu0 %v466
        %879 = vmatprep.subr.bf16.mxu0 %v465
        %880 = vmatpush1.bf16.msra.mxu0 %v464
        %881 = vmatprep.subr.bf16.mxu0 %v463
        %882 = vmatpush1.bf16.msra.mxu0 %v462
        %883 = vmatprep.subr.bf16.mxu0 %v461
        %884 = vmatpush1.bf16.msra.mxu0 %v460
        %885 = vmatprep.subr.bf16.mxu0 %v459
        %886 = vmatpush1.bf16.msra.mxu0 %v458
        %887 = vmatprep.subr.bf16.mxu0 %v457
        %888 = vmatpush1.bf16.msra.mxu0 %v456
        %889 = vmatprep.subr.bf16.mxu0 %v455
        %890 = vmatpush1.bf16.msra.mxu0 %v454
        %891 = vmatprep.subr.bf16.mxu0 %v453
        %892 = vmatpush1.bf16.msra.mxu0 %v452
        %893 = vmatprep.subr.bf16.mxu0 0
        %894 = vmatpush2.bf16.msra.mxu0 0
        %895 = vmatprep.subr.bf16.mxu0 0
        %896 = vmatpush2.bf16.msra.mxu0 0
        %897 = vmatprep.subr.bf16.mxu0 0
        %898 = vmatpush2.bf16.msra.mxu0 0
        %899 = vmatprep.subr.bf16.mxu0 0
        %900 = vmatpush2.bf16.msra.mxu0 0
        %901 = vmatprep.subr.bf16.mxu0 0
        %902 = vmatpush2.bf16.msra.mxu0 0
        %903 = vmatprep.subr.bf16.mxu0 0
        %904 = vmatpush2.bf16.msra.mxu0 0
        %905 = vmatprep.subr.bf16.mxu0 0
        %906 = vmatpush2.bf16.msra.mxu0 0
        %907 = vmatprep.subr.bf16.mxu0 0
        %908 = vmatpush2.bf16.msra.mxu0 0
        %909 = vmatprep.mubr.bf16.mxu0 0
        %910 = vmatmul.mubr.bf16.gmra.mxu0 %v873
        %v911 = vpop.f32.mrf.mxu0
        %v912 = vadd.f32 %v397, %v911
        %v913 = vpop.f32.mrf.mxu0
        %v914 = vadd.f32 %v401, %v913
        %v915 = vpop.f32.mrf.mxu0
        %v916 = vadd.f32 %v397, %v915
        %v917 = vpop.f32.mrf.mxu0
        %v918 = vadd.f32 %v401, %v917
        %919 = vmatprep.mubr.bf16.mxu0 0
        %920 = vmatmul.mubr.bf16.gmra.mxu0 %v874
        %v921 = vpop.f32.mrf.mxu0
        %v922 = vadd.f32 %v397, %v921
        %v923 = vpop.f32.mrf.mxu0
        %v924 = vadd.f32 %v401, %v923
        %v925 = vpop.f32.mrf.mxu0
        %v926 = vadd.f32 %v397, %v925
        %v927 = vpop.f32.mrf.mxu0
        %v928 = vadd.f32 %v401, %v927
        %929 = vmatprep.mubr.bf16.mxu0 0
        %930 = vmatmul.mubr.bf16.gmra.mxu0 %v875
        %v931 = vpop.f32.mrf.mxu0
        %v932 = vadd.f32 %v397, %v931
        %v933 = vpop.f32.mrf.mxu0
        %v934 = vadd.f32 %v401, %v933
        %v935 = vpop.f32.mrf.mxu0
        %v936 = vadd.f32 %v397, %v935
        %v937 = vpop.f32.mrf.mxu0
        %v938 = vadd.f32 %v401, %v937
        %939 = vmatprep.mubr.bf16.mxu0 0
        %940 = vmatmul.mubr.bf16.gmra.mxu0 %v876
        %v941 = vpop.f32.mrf.mxu0
        %v942 = vadd.f32 %v397, %v941
        %v943 = vpop.f32.mrf.mxu0
        %v944 = vadd.f32 %v401, %v943
        %v945 = vpop.f32.mrf.mxu0
        %v946 = vadd.f32 %v397, %v945
        %v947 = vpop.f32.mrf.mxu0
        %v948 = vadd.f32 %v401, %v947
        %949 = vdwg.mxu0
        %v950 = vmax.f32 %v912, 0.0
        %v951 = vmax.f32 %v914, 0.0
        %v952 = vmax.f32 %v916, 0.0
        %v953 = vmax.f32 %v918, 0.0
        %v954 = vmax.f32 %v922, 0.0
        %v955 = vmax.f32 %v924, 0.0
        %v956 = vmax.f32 %v926, 0.0
        %v957 = vmax.f32 %v928, 0.0
        %v958 = vmax.f32 %v932, 0.0
        %v959 = vmax.f32 %v934, 0.0
        %v960 = vmax.f32 %v936, 0.0
        %v961 = vmax.f32 %v938, 0.0
        %v962 = vmax.f32 %v942, 0.0
        %v963 = vmax.f32 %v944, 0.0
        %v964 = vmax.f32 %v946, 0.0
        %v965 = vmax.f32 %v948, 0.0
        %v966 = vpack.c.bf16 %v952, %v950
        %v967 = vpack.c.bf16 %v953, %v951
        %v968 = vpack.c.bf16 %v956, %v954
        %v969 = vpack.c.bf16 %v957, %v955
        %v970 = vpack.c.bf16 %v960, %v958
        %v971 = vpack.c.bf16 %v961, %v959
        %v972 = vpack.c.bf16 %v964, %v962
        %v973 = vpack.c.bf16 %v965, %v963
        %974 = vmatprep.subr.bf16.mxu0 0
        %975 = vmatpush1.bf16.msra.mxu0 %v658
        %976 = vmatprep.subr.bf16.mxu0 0
        %977 = vmatpush1.bf16.msra.mxu0 %v657
        %978 = vmatprep.subr.bf16.mxu0 0
        %979 = vmatpush1.bf16.msra.mxu0 %v656
        %980 = vmatprep.subr.bf16.mxu0 0
        %981 = vmatpush1.bf16.msra.mxu0 %v655
        %982 = vmatprep.subr.bf16.mxu0 0
        %983 = vmatpush1.bf16.msra.mxu0 %v654
        %984 = vmatprep.subr.bf16.mxu0 0
        %985 = vmatpush1.bf16.msra.mxu0 %v653
        %986 = vmatprep.subr.bf16.mxu0 0
        %987 = vmatpush1.bf16.msra.mxu0 %v652
        %988 = vmatprep.subr.bf16.mxu0 0
        %989 = vmatpush1.bf16.msra.mxu0 %v651
        %990 = vmatprep.subr.bf16.mxu0 0
        %991 = vmatpush2.bf16.msra.mxu0 %v666
        %992 = vmatprep.subr.bf16.mxu0 0
        %993 = vmatpush2.bf16.msra.mxu0 %v665
        %994 = vmatprep.subr.bf16.mxu0 0
        %995 = vmatpush2.bf16.msra.mxu0 %v664
        %996 = vmatprep.subr.bf16.mxu0 0
        %997 = vmatpush2.bf16.msra.mxu0 %v663
        %998 = vmatprep.subr.bf16.mxu0 0
        %999 = vmatpush2.bf16.msra.mxu0 %v662
        %1000 = vmatprep.subr.bf16.mxu0 0
        %1001 = vmatpush2.bf16.msra.mxu0 %v661
        %1002 = vmatprep.subr.bf16.mxu0 0
        %1003 = vmatpush2.bf16.msra.mxu0 %v660
        %1004 = vmatprep.subr.bf16.mxu0 0
        %1005 = vmatpush2.bf16.msra.mxu0 %v659
        %1006 = vmatprep.mubr.bf16.mxu0 %v967
        %1007 = vmatmul.mubr.bf16.gmra.mxu0 %v966
        %v1008 = vpop.f32.mrf.mxu0
        %v1009 = vadd.f32 %v585, %v1008
        %v1010 = vpop.f32.mrf.mxu0
        %v1011 = vpop.f32.mrf.mxu0
        %v1012 = vadd.f32 %v585, %v1011
        %v1013 = vpop.f32.mrf.mxu0
        %1014 = vmatprep.mubr.bf16.mxu0 %v969
        %1015 = vmatmul.mubr.bf16.gmra.mxu0 %v968
        %v1016 = vpop.f32.mrf.mxu0
        %v1017 = vadd.f32 %v585, %v1016
        %v1018 = vpop.f32.mrf.mxu0
        %v1019 = vpop.f32.mrf.mxu0
        %v1020 = vadd.f32 %v585, %v1019
        %v1021 = vpop.f32.mrf.mxu0
        %1022 = vmatprep.mubr.bf16.mxu0 %v971
        %1023 = vmatmul.mubr.bf16.gmra.mxu0 %v970
        %v1024 = vpop.f32.mrf.mxu0
        %v1025 = vadd.f32 %v585, %v1024
        %v1026 = vpop.f32.mrf.mxu0
        %v1027 = vpop.f32.mrf.mxu0
        %v1028 = vadd.f32 %v585, %v1027
        %v1029 = vpop.f32.mrf.mxu0
        %1030 = vmatprep.mubr.bf16.mxu0 %v973
        %1031 = vmatmul.mubr.bf16.gmra.mxu0 %v972
        %v1032 = vpop.f32.mrf.mxu0
        %v1033 = vadd.f32 %v585, %v1032
        %v1034 = vpop.f32.mrf.mxu0
        %v1035 = vpop.f32.mrf.mxu0
        %v1036 = vadd.f32 %v585, %v1035
        %v1037 = vpop.f32.mrf.mxu0
        %1038 = vdwg.mxu0
        %v1039 = vadd.f32 %v865, %v1009
        %v1040 = vadd.f32 %v866, %v1012
        %v1041 = vadd.f32 %v867, %v1017
        %v1042 = vadd.f32 %v868, %v1020
        %v1043 = vadd.f32 %v869, %v1025
        %v1044 = vadd.f32 %v870, %v1028
        %v1045 = vadd.f32 %v871, %v1033
        %v1046 = vadd.f32 %v872, %v1036
        %1047 = vadd.xlane.f32.xlu0 %v1039
        %v1048 = vpop.xlane.xlu0 %1047
        %1049 = vadd.xlane.f32.xlu0 %v1040
        %v1050 = vpop.xlane.xlu0 %1049
        %1051 = vadd.xlane.f32.xlu0 %v1041
        %v1052 = vpop.xlane.xlu0 %1051
        %1053 = vadd.xlane.f32.xlu0 %v1042
        %v1054 = vpop.xlane.xlu0 %1053
        %1055 = vadd.xlane.f32.xlu0 %v1043
        %v1056 = vpop.xlane.xlu0 %1055
        %1057 = vadd.xlane.f32.xlu0 %v1044
        %v1058 = vpop.xlane.xlu0 %1057
        %1059 = vadd.xlane.f32.xlu0 %v1045
        %v1060 = vpop.xlane.xlu0 %1059
        %1061 = vadd.xlane.f32.xlu0 %v1046
        %v1062 = vpop.xlane.xlu0 %1061
        %v1063 = vmul.f32 %v1048, %v772
        %v1064 = vmul.f32 %v1050, %v772
        %v1065 = vmul.f32 %v1052, %v772
        %v1066 = vmul.f32 %v1054, %v772
        %v1067 = vmul.f32 %v1056, %v772
        %v1068 = vmul.f32 %v1058, %v772
        %v1069 = vmul.f32 %v1060, %v772
        %v1070 = vmul.f32 %v1062, %v772
        %v1071 = vsub.f32 %v1039, %v1063
        %v1072 = vsub.f32 %v1040, %v1064
        %v1073 = vsub.f32 %v1041, %v1065
        %v1074 = vsub.f32 %v1042, %v1066
        %v1075 = vsub.f32 %v1043, %v1067
        %v1076 = vsub.f32 %v1044, %v1068
        %v1077 = vsub.f32 %v1045, %v1069
        %v1078 = vsub.f32 %v1046, %v1070
        %v1079 = vmul.f32 %v1071, %v1071
        %v1080 = vmul.f32 %v1072, %v1072
        %v1081 = vmul.f32 %v1073, %v1073
        %v1082 = vmul.f32 %v1074, %v1074
        %v1083 = vmul.f32 %v1075, %v1075
        %v1084 = vmul.f32 %v1076, %v1076
        %v1085 = vmul.f32 %v1077, %v1077
        %v1086 = vmul.f32 %v1078, %v1078
        %1087 = vadd.xlane.f32.xlu0 %v1079
        %v1088 = vpop.xlane.xlu0 %1087
        %1089 = vadd.xlane.f32.xlu0 %v1080
        %v1090 = vpop.xlane.xlu0 %1089
        %1091 = vadd.xlane.f32.xlu0 %v1081
        %v1092 = vpop.xlane.xlu0 %1091
        %1093 = vadd.xlane.f32.xlu0 %v1082
        %v1094 = vpop.xlane.xlu0 %1093
        %1095 = vadd.xlane.f32.xlu0 %v1083
        %v1096 = vpop.xlane.xlu0 %1095
        %1097 = vadd.xlane.f32.xlu0 %v1084
        %v1098 = vpop.xlane.xlu0 %1097
        %1099 = vadd.xlane.f32.xlu0 %v1085
        %v1100 = vpop.xlane.xlu0 %1099
        %1101 = vadd.xlane.f32.xlu0 %v1086
        %v1102 = vpop.xlane.xlu0 %1101
        %v1103 = vmul.f32 %v1088, %v772
        %v1104 = vmul.f32 %v1090, %v772
        %v1105 = vmul.f32 %v1092, %v772
        %v1106 = vmul.f32 %v1094, %v772
        %v1107 = vmul.f32 %v1096, %v772
        %v1108 = vmul.f32 %v1098, %v772
        %v1109 = vmul.f32 %v1100, %v772
        %v1110 = vmul.f32 %v1102, %v772
        %v1111 = vadd.f32 %v1103, 1e-05
        %v1112 = vadd.f32 %v1104, 1e-05
        %v1113 = vadd.f32 %v1105, 1e-05
        %v1114 = vadd.f32 %v1106, 1e-05
        %v1115 = vadd.f32 %v1107, 1e-05
        %v1116 = vadd.f32 %v1108, 1e-05
        %v1117 = vadd.f32 %v1109, 1e-05
        %v1118 = vadd.f32 %v1110, 1e-05
        %v1119 = vrsqrt.pop %v1111
        %v1120 = vrsqrt.pop %v1112
        %v1121 = vrsqrt.pop %v1113
        %v1122 = vrsqrt.pop %v1114
        %v1123 = vrsqrt.pop %v1115
        %v1124 = vrsqrt.pop %v1116
        %v1125 = vrsqrt.pop %v1117
        %v1126 = vrsqrt.pop %v1118
        %v1127 = vmul.f32 %v1071, %v1119
        %v1128 = vmul.f32 %v1072, %v1120
        %v1129 = vmul.f32 %v1073, %v1121
        %v1130 = vmul.f32 %v1074, %v1122
        %v1131 = vmul.f32 %v1075, %v1123
        %v1132 = vmul.f32 %v1076, %v1124
        %v1133 = vmul.f32 %v1077, %v1125
        %v1134 = vmul.f32 %v1078, %v1126
        %v1135 = vmul.f32 %v1127, %v849
        %v1136 = vmul.f32 %v1128, %v849
        %v1137 = vmul.f32 %v1129, %v849
        %v1138 = vmul.f32 %v1130, %v849
        %v1139 = vmul.f32 %v1131, %v849
        %v1140 = vmul.f32 %v1132, %v849
        %v1141 = vmul.f32 %v1133, %v849
        %v1142 = vmul.f32 %v1134, %v849
        %v1143 = vadd.f32 %v1135, %v863
        %v1144 = vadd.f32 %v1136, %v863
        %v1145 = vadd.f32 %v1137, %v863
        %v1146 = vadd.f32 %v1138, %v863
        %v1147 = vadd.f32 %v1139, %v863
        %v1148 = vadd.f32 %v1140, %v863
        %v1149 = vadd.f32 %v1141, %v863
        %v1150 = vadd.f32 %v1142, %v863
        %v1151 = vpack.c.bf16 %v1144, %v1143
        %v1152 = vpack.c.bf16 %v1146, %v1145
        %v1153 = vpack.c.bf16 %v1148, %v1147
        %v1154 = vpack.c.bf16 %v1150, %v1149
        %1155 = vmatprep.subr.bf16.mxu0 %v467
        %1156 = vmatpush1.bf16.msra.mxu0 %v466
        %1157 = vmatprep.subr.bf16.mxu0 %v465
        %1158 = vmatpush1.bf16.msra.mxu0 %v464
        %1159 = vmatprep.subr.bf16.mxu0 %v463
        %1160 = vmatpush1.bf16.msra.mxu0 %v462
        %1161 = vmatprep.subr.bf16.mxu0 %v461
        %1162 = vmatpush1.bf16.msra.mxu0 %v460
        %1163 = vmatprep.subr.bf16.mxu0 %v459
        %1164 = vmatpush1.bf16.msra.mxu0 %v458
        %1165 = vmatprep.subr.bf16.mxu0 %v457
        %1166 = vmatpush1.bf16.msra.mxu0 %v456
        %1167 = vmatprep.subr.bf16.mxu0 %v455
        %1168 = vmatpush1.bf16.msra.mxu0 %v454
        %1169 = vmatprep.subr.bf16.mxu0 %v453
        %1170 = vmatpush1.bf16.msra.mxu0 %v452
        %1171 = vmatprep.subr.bf16.mxu0 0
        %1172 = vmatpush2.bf16.msra.mxu0 0
        %1173 = vmatprep.subr.bf16.mxu0 0
        %1174 = vmatpush2.bf16.msra.mxu0 0
        %1175 = vmatprep.subr.bf16.mxu0 0
        %1176 = vmatpush2.bf16.msra.mxu0 0
        %1177 = vmatprep.subr.bf16.mxu0 0
        %1178 = vmatpush2.bf16.msra.mxu0 0
        %1179 = vmatprep.subr.bf16.mxu0 0
        %1180 = vmatpush2.bf16.msra.mxu0 0
        %1181 = vmatprep.subr.bf16.mxu0 0
        %1182 = vmatpush2.bf16.msra.mxu0 0
        %1183 = vmatprep.subr.bf16.mxu0 0
        %1184 = vmatpush2.bf16.msra.mxu0 0
        %1185 = vmatprep.subr.bf16.mxu0 0
        %1186 = vmatpush2.bf16.msra.mxu0 0
        %1187 = vmatprep.mubr.bf16.mxu0 0
        %1188 = vmatmul.mubr.bf16.gmra.mxu0 %v1151
        %v1189 = vpop.f32.mrf.mxu0
        %v1190 = vadd.f32 %v397, %v1189
        %v1191 = vpop.f32.mrf.mxu0
        %v1192 = vadd.f32 %v401, %v1191
        %v1193 = vpop.f32.mrf.mxu0
        %v1194 = vadd.f32 %v397, %v1193
        %v1195 = vpop.f32.mrf.mxu0
        %v1196 = vadd.f32 %v401, %v1195
        %1197 = vmatprep.mubr.bf16.mxu0 0
        %1198 = vmatmul.mubr.bf16.gmra.mxu0 %v1152
        %v1199 = vpop.f32.mrf.mxu0
        %v1200 = vadd.f32 %v397, %v1199
        %v1201 = vpop.f32.mrf.mxu0
        %v1202 = vadd.f32 %v401, %v1201
        %v1203 = vpop.f32.mrf.mxu0
        %v1204 = vadd.f32 %v397, %v1203
        %v1205 = vpop.f32.mrf.mxu0
        %v1206 = vadd.f32 %v401, %v1205
        %1207 = vmatprep.mubr.bf16.mxu0 0
        %1208 = vmatmul.mubr.bf16.gmra.mxu0 %v1153
        %v1209 = vpop.f32.mrf.mxu0
        %v1210 = vadd.f32 %v397, %v1209
        %v1211 = vpop.f32.mrf.mxu0
        %v1212 = vadd.f32 %v401, %v1211
        %v1213 = vpop.f32.mrf.mxu0
        %v1214 = vadd.f32 %v397, %v1213
        %v1215 = vpop.f32.mrf.mxu0
        %v1216 = vadd.f32 %v401, %v1215
        %1217 = vmatprep.mubr.bf16.mxu0 0
        %1218 = vmatmul.mubr.bf16.gmra.mxu0 %v1154
        %v1219 = vpop.f32.mrf.mxu0
        %v1220 = vadd.f32 %v397, %v1219
        %v1221 = vpop.f32.mrf.mxu0
        %v1222 = vadd.f32 %v401, %v1221
        %v1223 = vpop.f32.mrf.mxu0
        %v1224 = vadd.f32 %v397, %v1223
        %v1225 = vpop.f32.mrf.mxu0
        %v1226 = vadd.f32 %v401, %v1225
        %1227 = vdwg.mxu0
        %v1228 = vmax.f32 %v1190, 0.0
        %v1229 = vmax.f32 %v1192, 0.0
        %v1230 = vmax.f32 %v1194, 0.0
        %v1231 = vmax.f32 %v1196, 0.0
        %v1232 = vmax.f32 %v1200, 0.0
        %v1233 = vmax.f32 %v1202, 0.0
        %v1234 = vmax.f32 %v1204, 0.0
        %v1235 = vmax.f32 %v1206, 0.0
        %v1236 = vmax.f32 %v1210, 0.0
        %v1237 = vmax.f32 %v1212, 0.0
        %v1238 = vmax.f32 %v1214, 0.0
        %v1239 = vmax.f32 %v1216, 0.0
        %v1240 = vmax.f32 %v1220, 0.0
        %v1241 = vmax.f32 %v1222, 0.0
        %v1242 = vmax.f32 %v1224, 0.0
        %v1243 = vmax.f32 %v1226, 0.0
        %v1244 = vpack.c.bf16 %v1230, %v1228
        %v1245 = vpack.c.bf16 %v1231, %v1229
        %v1246 = vpack.c.bf16 %v1234, %v1232
        %v1247 = vpack.c.bf16 %v1235, %v1233
        %v1248 = vpack.c.bf16 %v1238, %v1236
        %v1249 = vpack.c.bf16 %v1239, %v1237
        %v1250 = vpack.c.bf16 %v1242, %v1240
        %v1251 = vpack.c.bf16 %v1243, %v1241
        %1252 = vmatprep.subr.bf16.mxu0 0
        %1253 = vmatpush1.bf16.msra.mxu0 %v658
        %1254 = vmatprep.subr.bf16.mxu0 0
        %1255 = vmatpush1.bf16.msra.mxu0 %v657
        %1256 = vmatprep.subr.bf16.mxu0 0
        %1257 = vmatpush1.bf16.msra.mxu0 %v656
        %1258 = vmatprep.subr.bf16.mxu0 0
        %1259 = vmatpush1.bf16.msra.mxu0 %v655
        %1260 = vmatprep.subr.bf16.mxu0 0
        %1261 = vmatpush1.bf16.msra.mxu0 %v654
        %1262 = vmatprep.subr.bf16.mxu0 0
        %1263 = vmatpush1.bf16.msra.mxu0 %v653
        %1264 = vmatprep.subr.bf16.mxu0 0
        %1265 = vmatpush1.bf16.msra.mxu0 %v652
        %1266 = vmatprep.subr.bf16.mxu0 0
        %1267 = vmatpush1.bf16.msra.mxu0 %v651
        %1268 = vmatprep.subr.bf16.mxu0 0
        %1269 = vmatpush2.bf16.msra.mxu0 %v666
        %1270 = vmatprep.subr.bf16.mxu0 0
        %1271 = vmatpush2.bf16.msra.mxu0 %v665
        %1272 = vmatprep.subr.bf16.mxu0 0
        %1273 = vmatpush2.bf16.msra.mxu0 %v664
        %1274 = vmatprep.subr.bf16.mxu0 0
        %1275 = vmatpush2.bf16.msra.mxu0 %v663
        %1276 = vmatprep.subr.bf16.mxu0 0
        %1277 = vmatpush2.bf16.msra.mxu0 %v662
        %1278 = vmatprep.subr.bf16.mxu0 0
        %1279 = vmatpush2.bf16.msra.mxu0 %v661
        %1280 = vmatprep.subr.bf16.mxu0 0
        %1281 = vmatpush2.bf16.msra.mxu0 %v660
        %1282 = vmatprep.subr.bf16.mxu0 0
        %1283 = vmatpush2.bf16.msra.mxu0 %v659
        %1284 = vmatprep.mubr.bf16.mxu0 %v1245
        %1285 = vmatmul.mubr.bf16.gmra.mxu0 %v1244
        %v1286 = vpop.f32.mrf.mxu0
        %v1287 = vadd.f32 %v585, %v1286
        %v1288 = vpop.f32.mrf.mxu0
        %v1289 = vpop.f32.mrf.mxu0
        %v1290 = vadd.f32 %v585, %v1289
        %v1291 = vpop.f32.mrf.mxu0
        %1292 = vmatprep.mubr.bf16.mxu0 %v1247
        %1293 = vmatmul.mubr.bf16.gmra.mxu0 %v1246
        %v1294 = vpop.f32.mrf.mxu0
        %v1295 = vadd.f32 %v585, %v1294
        %v1296 = vpop.f32.mrf.mxu0
        %v1297 = vpop.f32.mrf.mxu0
        %v1298 = vadd.f32 %v585, %v1297
        %v1299 = vpop.f32.mrf.mxu0
        %1300 = vmatprep.mubr.bf16.mxu0 %v1249
        %1301 = vmatmul.mubr.bf16.gmra.mxu0 %v1248
        %v1302 = vpop.f32.mrf.mxu0
        %v1303 = vadd.f32 %v585, %v1302
        %v1304 = vpop.f32.mrf.mxu0
        %v1305 = vpop.f32.mrf.mxu0
        %v1306 = vadd.f32 %v585, %v1305
        %v1307 = vpop.f32.mrf.mxu0
        %1308 = vmatprep.mubr.bf16.mxu0 %v1251
        %1309 = vmatmul.mubr.bf16.gmra.mxu0 %v1250
        %v1310 = vpop.f32.mrf.mxu0
        %v1311 = vadd.f32 %v585, %v1310
        %v1312 = vpop.f32.mrf.mxu0
        %v1313 = vpop.f32.mrf.mxu0
        %v1314 = vadd.f32 %v585, %v1313
        %v1315 = vpop.f32.mrf.mxu0
        %1316 = vdwg.mxu0
        %v1317 = vadd.f32 %v1143, %v1287
        %v1318 = vadd.f32 %v1144, %v1290
        %v1319 = vadd.f32 %v1145, %v1295
        %v1320 = vadd.f32 %v1146, %v1298
        %v1321 = vadd.f32 %v1147, %v1303
        %v1322 = vadd.f32 %v1148, %v1306
        %v1323 = vadd.f32 %v1149, %v1311
        %v1324 = vadd.f32 %v1150, %v1314
        %1325 = vadd.xlane.f32.xlu0 %v1317
        %v1326 = vpop.xlane.xlu0 %1325
        %1327 = vadd.xlane.f32.xlu0 %v1318
        %v1328 = vpop.xlane.xlu0 %1327
        %1329 = vadd.xlane.f32.xlu0 %v1319
        %v1330 = vpop.xlane.xlu0 %1329
        %1331 = vadd.xlane.f32.xlu0 %v1320
        %v1332 = vpop.xlane.xlu0 %1331
        %1333 = vadd.xlane.f32.xlu0 %v1321
        %v1334 = vpop.xlane.xlu0 %1333
        %1335 = vadd.xlane.f32.xlu0 %v1322
        %v1336 = vpop.xlane.xlu0 %1335
        %1337 = vadd.xlane.f32.xlu0 %v1323
        %v1338 = vpop.xlane.xlu0 %1337
        %1339 = vadd.xlane.f32.xlu0 %v1324
        %v1340 = vpop.xlane.xlu0 %1339
        %v1341 = vmul.f32 %v1326, %v772
        %v1342 = vmul.f32 %v1328, %v772
        %v1343 = vmul.f32 %v1330, %v772
        %v1344 = vmul.f32 %v1332, %v772
        %v1345 = vmul.f32 %v1334, %v772
        %v1346 = vmul.f32 %v1336, %v772
        %v1347 = vmul.f32 %v1338, %v772
        %v1348 = vmul.f32 %v1340, %v772
        %v1349 = vsub.f32 %v1317, %v1341
        %v1350 = vsub.f32 %v1318, %v1342
        %v1351 = vsub.f32 %v1319, %v1343
        %v1352 = vsub.f32 %v1320, %v1344
        %v1353 = vsub.f32 %v1321, %v1345
        %v1354 = vsub.f32 %v1322, %v1346
        %v1355 = vsub.f32 %v1323, %v1347
        %v1356 = vsub.f32 %v1324, %v1348
        %v1357 = vmul.f32 %v1349, %v1349
        %v1358 = vmul.f32 %v1350, %v1350
        %v1359 = vmul.f32 %v1351, %v1351
        %v1360 = vmul.f32 %v1352, %v1352
        %v1361 = vmul.f32 %v1353, %v1353
        %v1362 = vmul.f32 %v1354, %v1354
        %v1363 = vmul.f32 %v1355, %v1355
        %v1364 = vmul.f32 %v1356, %v1356
        %1365 = vadd.xlane.f32.xlu0 %v1357
        %v1366 = vpop.xlane.xlu0 %1365
        %1367 = vadd.xlane.f32.xlu0 %v1358
        %v1368 = vpop.xlane.xlu0 %1367
        %1369 = vadd.xlane.f32.xlu0 %v1359
        %v1370 = vpop.xlane.xlu0 %1369
        %1371 = vadd.xlane.f32.xlu0 %v1360
        %v1372 = vpop.xlane.xlu0 %1371
        %1373 = vadd.xlane.f32.xlu0 %v1361
        %v1374 = vpop.xlane.xlu0 %1373
        %1375 = vadd.xlane.f32.xlu0 %v1362
        %v1376 = vpop.xlane.xlu0 %1375
        %1377 = vadd.xlane.f32.xlu0 %v1363
        %v1378 = vpop.xlane.xlu0 %1377
        %1379 = vadd.xlane.f32.xlu0 %v1364
        %v1380 = vpop.xlane.xlu0 %1379
        %v1381 = vmul.f32 %v1366, %v772
        %v1382 = vmul.f32 %v1368, %v772
        %v1383 = vmul.f32 %v1370, %v772
        %v1384 = vmul.f32 %v1372, %v772
        %v1385 = vmul.f32 %v1374, %v772
        %v1386 = vmul.f32 %v1376, %v772
        %v1387 = vmul.f32 %v1378, %v772
        %v1388 = vmul.f32 %v1380, %v772
        %v1389 = vadd.f32 %v1381, 1e-05
        %v1390 = vadd.f32 %v1382, 1e-05
        %v1391 = vadd.f32 %v1383, 1e-05
        %v1392 = vadd.f32 %v1384, 1e-05
        %v1393 = vadd.f32 %v1385, 1e-05
        %v1394 = vadd.f32 %v1386, 1e-05
        %v1395 = vadd.f32 %v1387, 1e-05
        %v1396 = vadd.f32 %v1388, 1e-05
        %v1397 = vrsqrt.pop %v1389
        %v1398 = vrsqrt.pop %v1390
        %v1399 = vrsqrt.pop %v1391
        %v1400 = vrsqrt.pop %v1392
        %v1401 = vrsqrt.pop %v1393
        %v1402 = vrsqrt.pop %v1394
        %v1403 = vrsqrt.pop %v1395
        %v1404 = vrsqrt.pop %v1396
        %v1405 = vmul.f32 %v1349, %v1397
        %v1406 = vmul.f32 %v1350, %v1398
        %v1407 = vmul.f32 %v1351, %v1399
        %v1408 = vmul.f32 %v1352, %v1400
        %v1409 = vmul.f32 %v1353, %v1401
        %v1410 = vmul.f32 %v1354, %v1402
        %v1411 = vmul.f32 %v1355, %v1403
        %v1412 = vmul.f32 %v1356, %v1404
        %v1413 = vmul.f32 %v1405, %v849
        %v1414 = vmul.f32 %v1406, %v849
        %v1415 = vmul.f32 %v1407, %v849
        %v1416 = vmul.f32 %v1408, %v849
        %v1417 = vmul.f32 %v1409, %v849
        %v1418 = vmul.f32 %v1410, %v849
        %v1419 = vmul.f32 %v1411, %v849
        %v1420 = vmul.f32 %v1412, %v849
        %v1421 = vadd.f32 %v1413, %v863
        %v1422 = vadd.f32 %v1414, %v863
        %v1423 = vadd.f32 %v1415, %v863
        %v1424 = vadd.f32 %v1416, %v863
        %v1425 = vadd.f32 %v1417, %v863
        %v1426 = vadd.f32 %v1418, %v863
        %v1427 = vadd.f32 %v1419, %v863
        %v1428 = vadd.f32 %v1420, %v863
        %v1429 = vpack.c.bf16 %v1422, %v1421
        %v1430 = vpack.c.bf16 %v1424, %v1423
        %v1431 = vpack.c.bf16 %v1426, %v1425
        %v1432 = vpack.c.bf16 %v1428, %v1427
        %1433 = vmatprep.subr.bf16.mxu0 %v467
        %1434 = vmatpush1.bf16.msra.mxu0 %v466
        %1435 = vmatprep.subr.bf16.mxu0 %v465
        %1436 = vmatpush1.bf16.msra.mxu0 %v464
        %1437 = vmatprep.subr.bf16.mxu0 %v463
        %1438 = vmatpush1.bf16.msra.mxu0 %v462
        %1439 = vmatprep.subr.bf16.mxu0 %v461
        %1440 = vmatpush1.bf16.msra.mxu0 %v460
        %1441 = vmatprep.subr.bf16.mxu0 %v459
        %1442 = vmatpush1.bf16.msra.mxu0 %v458
        %1443 = vmatprep.subr.bf16.mxu0 %v457
        %1444 = vmatpush1.bf16.msra.mxu0 %v456
        %1445 = vmatprep.subr.bf16.mxu0 %v455
        %1446 = vmatpush1.bf16.msra.mxu0 %v454
        %1447 = vmatprep.subr.bf16.mxu0 %v453
        %1448 = vmatpush1.bf16.msra.mxu0 %v452
        %1449 = vmatprep.subr.bf16.mxu0 0
        %1450 = vmatpush2.bf16.msra.mxu0 0
        %1451 = vmatprep.subr.bf16.mxu0 0
        %1452 = vmatpush2.bf16.msra.mxu0 0
        %1453 = vmatprep.subr.bf16.mxu0 0
        %1454 = vmatpush2.bf16.msra.mxu0 0
        %1455 = vmatprep.subr.bf16.mxu0 0
        %1456 = vmatpush2.bf16.msra.mxu0 0
        %1457 = vmatprep.subr.bf16.mxu0 0
        %1458 = vmatpush2.bf16.msra.mxu0 0
        %1459 = vmatprep.subr.bf16.mxu0 0
        %1460 = vmatpush2.bf16.msra.mxu0 0
        %1461 = vmatprep.subr.bf16.mxu0 0
        %1462 = vmatpush2.bf16.msra.mxu0 0
        %1463 = vmatprep.subr.bf16.mxu0 0
        %1464 = vmatpush2.bf16.msra.mxu0 0
        %1465 = vmatprep.mubr.bf16.mxu0 0
        %1466 = vmatmul.mubr.bf16.gmra.mxu0 %v1429
        %v1467 = vpop.f32.mrf.mxu0
        %v1468 = vadd.f32 %v397, %v1467
        %v1469 = vpop.f32.mrf.mxu0
        %v1470 = vadd.f32 %v401, %v1469
        %v1471 = vpop.f32.mrf.mxu0
        %v1472 = vadd.f32 %v397, %v1471
        %v1473 = vpop.f32.mrf.mxu0
        %v1474 = vadd.f32 %v401, %v1473
        %1475 = vmatprep.mubr.bf16.mxu0 0
        %1476 = vmatmul.mubr.bf16.gmra.mxu0 %v1430
        %v1477 = vpop.f32.mrf.mxu0
        %v1478 = vadd.f32 %v397, %v1477
        %v1479 = vpop.f32.mrf.mxu0
        %v1480 = vadd.f32 %v401, %v1479
        %v1481 = vpop.f32.mrf.mxu0
        %v1482 = vadd.f32 %v397, %v1481
        %v1483 = vpop.f32.mrf.mxu0
        %v1484 = vadd.f32 %v401, %v1483
        %1485 = vmatprep.mubr.bf16.mxu0 0
        %1486 = vmatmul.mubr.bf16.gmra.mxu0 %v1431
        %v1487 = vpop.f32.mrf.mxu0
        %v1488 = vadd.f32 %v397, %v1487
        %v1489 = vpop.f32.mrf.mxu0
        %v1490 = vadd.f32 %v401, %v1489
        %v1491 = vpop.f32.mrf.mxu0
        %v1492 = vadd.f32 %v397, %v1491
        %v1493 = vpop.f32.mrf.mxu0
        %v1494 = vadd.f32 %v401, %v1493
        %1495 = vmatprep.mubr.bf16.mxu0 0
        %1496 = vmatmul.mubr.bf16.gmra.mxu0 %v1432
        %v1497 = vpop.f32.mrf.mxu0
        %v1498 = vadd.f32 %v397, %v1497
        %v1499 = vpop.f32.mrf.mxu0
        %v1500 = vadd.f32 %v401, %v1499
        %v1501 = vpop.f32.mrf.mxu0
        %v1502 = vadd.f32 %v397, %v1501
        %v1503 = vpop.f32.mrf.mxu0
        %v1504 = vadd.f32 %v401, %v1503
        %1505 = vdwg.mxu0
        %v1506 = vmax.f32 %v1468, 0.0
        %v1507 = vmax.f32 %v1470, 0.0
        %v1508 = vmax.f32 %v1472, 0.0
        %v1509 = vmax.f32 %v1474, 0.0
        %v1510 = vmax.f32 %v1478, 0.0
        %v1511 = vmax.f32 %v1480, 0.0
        %v1512 = vmax.f32 %v1482, 0.0
        %v1513 = vmax.f32 %v1484, 0.0
        %v1514 = vmax.f32 %v1488, 0.0
        %v1515 = vmax.f32 %v1490, 0.0
        %v1516 = vmax.f32 %v1492, 0.0
        %v1517 = vmax.f32 %v1494, 0.0
        %v1518 = vmax.f32 %v1498, 0.0
        %v1519 = vmax.f32 %v1500, 0.0
        %v1520 = vmax.f32 %v1502, 0.0
        %v1521 = vmax.f32 %v1504, 0.0
        %v1522 = vpack.c.bf16 %v1508, %v1506
        %v1523 = vpack.c.bf16 %v1509, %v1507
        %v1524 = vpack.c.bf16 %v1512, %v1510
        %v1525 = vpack.c.bf16 %v1513, %v1511
        %v1526 = vpack.c.bf16 %v1516, %v1514
        %v1527 = vpack.c.bf16 %v1517, %v1515
        %v1528 = vpack.c.bf16 %v1520, %v1518
        %v1529 = vpack.c.bf16 %v1521, %v1519
        %1530 = vmatprep.subr.bf16.mxu0 0
        %1531 = vmatpush1.bf16.msra.mxu0 %v658
        %1532 = vmatprep.subr.bf16.mxu0 0
        %1533 = vmatpush1.bf16.msra.mxu0 %v657
        %1534 = vmatprep.subr.bf16.mxu0 0
        %1535 = vmatpush1.bf16.msra.mxu0 %v656
        %1536 = vmatprep.subr.bf16.mxu0 0
        %1537 = vmatpush1.bf16.msra.mxu0 %v655
        %1538 = vmatprep.subr.bf16.mxu0 0
        %1539 = vmatpush1.bf16.msra.mxu0 %v654
        %1540 = vmatprep.subr.bf16.mxu0 0
        %1541 = vmatpush1.bf16.msra.mxu0 %v653
        %1542 = vmatprep.subr.bf16.mxu0 0
        %1543 = vmatpush1.bf16.msra.mxu0 %v652
        %1544 = vmatprep.subr.bf16.mxu0 0
        %1545 = vmatpush1.bf16.msra.mxu0 %v651
        %1546 = vmatprep.subr.bf16.mxu0 0
        %1547 = vmatpush2.bf16.msra.mxu0 %v666
        %1548 = vmatprep.subr.bf16.mxu0 0
        %1549 = vmatpush2.bf16.msra.mxu0 %v665
        %1550 = vmatprep.subr.bf16.mxu0 0
        %1551 = vmatpush2.bf16.msra.mxu0 %v664
        %1552 = vmatprep.subr.bf16.mxu0 0
        %1553 = vmatpush2.bf16.msra.mxu0 %v663
        %1554 = vmatprep.subr.bf16.mxu0 0
        %1555 = vmatpush2.bf16.msra.mxu0 %v662
        %1556 = vmatprep.subr.bf16.mxu0 0
        %1557 = vmatpush2.bf16.msra.mxu0 %v661
        %1558 = vmatprep.subr.bf16.mxu0 0
        %1559 = vmatpush2.bf16.msra.mxu0 %v660
        %1560 = vmatprep.subr.bf16.mxu0 0
        %1561 = vmatpush2.bf16.msra.mxu0 %v659
        %1562 = vmatprep.mubr.bf16.mxu0 %v1523
        %1563 = vmatmul.mubr.bf16.gmra.mxu0 %v1522
        %v1564 = vpop.f32.mrf.mxu0
        %v1565 = vadd.f32 %v585, %v1564
        %v1566 = vpop.f32.mrf.mxu0
        %v1567 = vpop.f32.mrf.mxu0
        %v1568 = vadd.f32 %v585, %v1567
        %v1569 = vpop.f32.mrf.mxu0
        %1570 = vmatprep.mubr.bf16.mxu0 %v1525
        %1571 = vmatmul.mubr.bf16.gmra.mxu0 %v1524
        %v1572 = vpop.f32.mrf.mxu0
        %v1573 = vadd.f32 %v585, %v1572
        %v1574 = vpop.f32.mrf.mxu0
        %v1575 = vpop.f32.mrf.mxu0
        %v1576 = vadd.f32 %v585, %v1575
        %v1577 = vpop.f32.mrf.mxu0
        %1578 = vmatprep.mubr.bf16.mxu0 %v1527
        %1579 = vmatmul.mubr.bf16.gmra.mxu0 %v1526
        %v1580 = vpop.f32.mrf.mxu0
        %v1581 = vadd.f32 %v585, %v1580
        %v1582 = vpop.f32.mrf.mxu0
        %v1583 = vpop.f32.mrf.mxu0
        %v1584 = vadd.f32 %v585, %v1583
        %v1585 = vpop.f32.mrf.mxu0
        %1586 = vmatprep.mubr.bf16.mxu0 %v1529
        %1587 = vmatmul.mubr.bf16.gmra.mxu0 %v1528
        %v1588 = vpop.f32.mrf.mxu0
        %v1589 = vadd.f32 %v585, %v1588
        %v1590 = vpop.f32.mrf.mxu0
        %v1591 = vpop.f32.mrf.mxu0
        %v1592 = vadd.f32 %v585, %v1591
        %v1593 = vpop.f32.mrf.mxu0
        %1594 = vdwg.mxu0
        %v1595 = vadd.f32 %v1421, %v1565
        %v1596 = vadd.f32 %v1422, %v1568
        %v1597 = vadd.f32 %v1423, %v1573
        %v1598 = vadd.f32 %v1424, %v1576
        %v1599 = vadd.f32 %v1425, %v1581
        %v1600 = vadd.f32 %v1426, %v1584
        %v1601 = vadd.f32 %v1427, %v1589
        %v1602 = vadd.f32 %v1428, %v1592
        %1603 = vadd.xlane.f32.xlu0 %v1595
        %v1604 = vpop.xlane.xlu0 %1603
        %1605 = vadd.xlane.f32.xlu0 %v1596
        %v1606 = vpop.xlane.xlu0 %1605
        %1607 = vadd.xlane.f32.xlu0 %v1597
        %v1608 = vpop.xlane.xlu0 %1607
        %1609 = vadd.xlane.f32.xlu0 %v1598
        %v1610 = vpop.xlane.xlu0 %1609
        %1611 = vadd.xlane.f32.xlu0 %v1599
        %v1612 = vpop.xlane.xlu0 %1611
        %1613 = vadd.xlane.f32.xlu0 %v1600
        %v1614 = vpop.xlane.xlu0 %1613
        %1615 = vadd.xlane.f32.xlu0 %v1601
        %v1616 = vpop.xlane.xlu0 %1615
        %1617 = vadd.xlane.f32.xlu0 %v1602
        %v1618 = vpop.xlane.xlu0 %1617
        %v1619 = vmul.f32 %v1604, %v772
        %v1620 = vmul.f32 %v1606, %v772
        %v1621 = vmul.f32 %v1608, %v772
        %v1622 = vmul.f32 %v1610, %v772
        %v1623 = vmul.f32 %v1612, %v772
        %v1624 = vmul.f32 %v1614, %v772
        %v1625 = vmul.f32 %v1616, %v772
        %v1626 = vmul.f32 %v1618, %v772
        %v1627 = vsub.f32 %v1595, %v1619
        %v1628 = vsub.f32 %v1596, %v1620
        %v1629 = vsub.f32 %v1597, %v1621
        %v1630 = vsub.f32 %v1598, %v1622
        %v1631 = vsub.f32 %v1599, %v1623
        %v1632 = vsub.f32 %v1600, %v1624
        %v1633 = vsub.f32 %v1601, %v1625
        %v1634 = vsub.f32 %v1602, %v1626
        %v1635 = vmul.f32 %v1627, %v1627
        %v1636 = vmul.f32 %v1628, %v1628
        %v1637 = vmul.f32 %v1629, %v1629
        %v1638 = vmul.f32 %v1630, %v1630
        %v1639 = vmul.f32 %v1631, %v1631
        %v1640 = vmul.f32 %v1632, %v1632
        %v1641 = vmul.f32 %v1633, %v1633
        %v1642 = vmul.f32 %v1634, %v1634
        %1643 = vadd.xlane.f32.xlu0 %v1635
        %v1644 = vpop.xlane.xlu0 %1643
        %1645 = vadd.xlane.f32.xlu0 %v1636
        %v1646 = vpop.xlane.xlu0 %1645
        %1647 = vadd.xlane.f32.xlu0 %v1637
        %v1648 = vpop.xlane.xlu0 %1647
        %1649 = vadd.xlane.f32.xlu0 %v1638
        %v1650 = vpop.xlane.xlu0 %1649
        %1651 = vadd.xlane.f32.xlu0 %v1639
        %v1652 = vpop.xlane.xlu0 %1651
        %1653 = vadd.xlane.f32.xlu0 %v1640
        %v1654 = vpop.xlane.xlu0 %1653
        %1655 = vadd.xlane.f32.xlu0 %v1641
        %v1656 = vpop.xlane.xlu0 %1655
        %1657 = vadd.xlane.f32.xlu0 %v1642
        %v1658 = vpop.xlane.xlu0 %1657
        %v1659 = vmul.f32 %v1644, %v772
        %v1660 = vmul.f32 %v1646, %v772
        %v1661 = vmul.f32 %v1648, %v772
        %v1662 = vmul.f32 %v1650, %v772
        %v1663 = vmul.f32 %v1652, %v772
        %v1664 = vmul.f32 %v1654, %v772
        %v1665 = vmul.f32 %v1656, %v772
        %v1666 = vmul.f32 %v1658, %v772
        %v1667 = vadd.f32 %v1659, 1e-05
        %v1668 = vadd.f32 %v1660, 1e-05
        %v1669 = vadd.f32 %v1661, 1e-05
        %v1670 = vadd.f32 %v1662, 1e-05
        %v1671 = vadd.f32 %v1663, 1e-05
        %v1672 = vadd.f32 %v1664, 1e-05
        %v1673 = vadd.f32 %v1665, 1e-05
        %v1674 = vadd.f32 %v1666, 1e-05
        %v1675 = vrsqrt.pop %v1667
        %v1676 = vrsqrt.pop %v1668
        %v1677 = vrsqrt.pop %v1669
        %v1678 = vrsqrt.pop %v1670
        %v1679 = vrsqrt.pop %v1671
        %v1680 = vrsqrt.pop %v1672
        %v1681 = vrsqrt.pop %v1673
        %v1682 = vrsqrt.pop %v1674
        %v1683 = vmul.f32 %v1627, %v1675
        %v1684 = vmul.f32 %v1628, %v1676
        %v1685 = vmul.f32 %v1629, %v1677
        %v1686 = vmul.f32 %v1630, %v1678
        %v1687 = vmul.f32 %v1631, %v1679
        %v1688 = vmul.f32 %v1632, %v1680
        %v1689 = vmul.f32 %v1633, %v1681
        %v1690 = vmul.f32 %v1634, %v1682
        %v1691 = vmul.f32 %v1683, %v849
        %v1692 = vmul.f32 %v1684, %v849
        %v1693 = vmul.f32 %v1685, %v849
        %v1694 = vmul.f32 %v1686, %v849
        %v1695 = vmul.f32 %v1687, %v849
        %v1696 = vmul.f32 %v1688, %v849
        %v1697 = vmul.f32 %v1689, %v849
        %v1698 = vmul.f32 %v1690, %v849
        %v1699 = vadd.f32 %v1691, %v863
        %v1700 = vadd.f32 %v1692, %v863
        %v1701 = vadd.f32 %v1693, %v863
        %v1702 = vadd.f32 %v1694, %v863
        %v1703 = vadd.f32 %v1695, %v863
        %v1704 = vadd.f32 %v1696, %v863
        %v1705 = vadd.f32 %v1697, %v863
        %v1706 = vadd.f32 %v1698, %v863
        %v1707 = vpack.c.bf16 %v1700, %v1699
        %v1708 = vpack.c.bf16 %v1702, %v1701
        %v1709 = vpack.c.bf16 %v1704, %v1703
        %v1710 = vpack.c.bf16 %v1706, %v1705
        %1711 = vmatprep.subr.bf16.mxu0 %v467
        %1712 = vmatpush1.bf16.msra.mxu0 %v466
        %1713 = vmatprep.subr.bf16.mxu0 %v465
        %1714 = vmatpush1.bf16.msra.mxu0 %v464
        %1715 = vmatprep.subr.bf16.mxu0 %v463
        %1716 = vmatpush1.bf16.msra.mxu0 %v462
        %1717 = vmatprep.subr.bf16.mxu0 %v461
        %1718 = vmatpush1.bf16.msra.mxu0 %v460
        %1719 = vmatprep.subr.bf16.mxu0 %v459
        %1720 = vmatpush1.bf16.msra.mxu0 %v458
        %1721 = vmatprep.subr.bf16.mxu0 %v457
        %1722 = vmatpush1.bf16.msra.mxu0 %v456
        %1723 = vmatprep.subr.bf16.mxu0 %v455
        %1724 = vmatpush1.bf16.msra.mxu0 %v454
        %1725 = vmatprep.subr.bf16.mxu0 %v453
        %1726 = vmatpush1.bf16.msra.mxu0 %v452
        %1727 = vmatprep.subr.bf16.mxu0 0
        %1728 = vmatpush2.bf16.msra.mxu0 0
        %1729 = vmatprep.subr.bf16.mxu0 0
        %1730 = vmatpush2.bf16.msra.mxu0 0
        %1731 = vmatprep.subr.bf16.mxu0 0
        %1732 = vmatpush2.bf16.msra.mxu0 0
        %1733 = vmatprep.subr.bf16.mxu0 0
        %1734 = vmatpush2.bf16.msra.mxu0 0
        %1735 = vmatprep.subr.bf16.mxu0 0
        %1736 = vmatpush2.bf16.msra.mxu0 0
        %1737 = vmatprep.subr.bf16.mxu0 0
        %1738 = vmatpush2.bf16.msra.mxu0 0
        %1739 = vmatprep.subr.bf16.mxu0 0
        %1740 = vmatpush2.bf16.msra.mxu0 0
        %1741 = vmatprep.subr.bf16.mxu0 0
        %1742 = vmatpush2.bf16.msra.mxu0 0
        %1743 = vmatprep.mubr.bf16.mxu0 0
        %1744 = vmatmul.mubr.bf16.gmra.mxu0 %v1707
        %v1745 = vpop.f32.mrf.mxu0
        %v1746 = vadd.f32 %v397, %v1745
        %v1747 = vpop.f32.mrf.mxu0
        %v1748 = vadd.f32 %v401, %v1747
        %v1749 = vpop.f32.mrf.mxu0
        %v1750 = vadd.f32 %v397, %v1749
        %v1751 = vpop.f32.mrf.mxu0
        %v1752 = vadd.f32 %v401, %v1751
        %1753 = vmatprep.mubr.bf16.mxu0 0
        %1754 = vmatmul.mubr.bf16.gmra.mxu0 %v1708
        %v1755 = vpop.f32.mrf.mxu0
        %v1756 = vadd.f32 %v397, %v1755
        %v1757 = vpop.f32.mrf.mxu0
        %v1758 = vadd.f32 %v401, %v1757
        %v1759 = vpop.f32.mrf.mxu0
        %v1760 = vadd.f32 %v397, %v1759
        %v1761 = vpop.f32.mrf.mxu0
        %v1762 = vadd.f32 %v401, %v1761
        %1763 = vmatprep.mubr.bf16.mxu0 0
        %1764 = vmatmul.mubr.bf16.gmra.mxu0 %v1709
        %v1765 = vpop.f32.mrf.mxu0
        %v1766 = vadd.f32 %v397, %v1765
        %v1767 = vpop.f32.mrf.mxu0
        %v1768 = vadd.f32 %v401, %v1767
        %v1769 = vpop.f32.mrf.mxu0
        %v1770 = vadd.f32 %v397, %v1769
        %v1771 = vpop.f32.mrf.mxu0
        %v1772 = vadd.f32 %v401, %v1771
        %1773 = vmatprep.mubr.bf16.mxu0 0
        %1774 = vmatmul.mubr.bf16.gmra.mxu0 %v1710
        %v1775 = vpop.f32.mrf.mxu0
        %v1776 = vadd.f32 %v397, %v1775
        %v1777 = vpop.f32.mrf.mxu0
        %v1778 = vadd.f32 %v401, %v1777
        %v1779 = vpop.f32.mrf.mxu0
        %v1780 = vadd.f32 %v397, %v1779
        %v1781 = vpop.f32.mrf.mxu0
        %v1782 = vadd.f32 %v401, %v1781
        %1783 = vdwg.mxu0
        %v1784 = vmax.f32 %v1746, 0.0
        %v1785 = vmax.f32 %v1748, 0.0
        %v1786 = vmax.f32 %v1750, 0.0
        %v1787 = vmax.f32 %v1752, 0.0
        %v1788 = vmax.f32 %v1756, 0.0
        %v1789 = vmax.f32 %v1758, 0.0
        %v1790 = vmax.f32 %v1760, 0.0
        %v1791 = vmax.f32 %v1762, 0.0
        %v1792 = vmax.f32 %v1766, 0.0
        %v1793 = vmax.f32 %v1768, 0.0
        %v1794 = vmax.f32 %v1770, 0.0
        %v1795 = vmax.f32 %v1772, 0.0
        %v1796 = vmax.f32 %v1776, 0.0
        %v1797 = vmax.f32 %v1778, 0.0
        %v1798 = vmax.f32 %v1780, 0.0
        %v1799 = vmax.f32 %v1782, 0.0
        %v1800 = vpack.c.bf16 %v1786, %v1784
        %v1801 = vpack.c.bf16 %v1787, %v1785
        %v1802 = vpack.c.bf16 %v1790, %v1788
        %v1803 = vpack.c.bf16 %v1791, %v1789
        %v1804 = vpack.c.bf16 %v1794, %v1792
        %v1805 = vpack.c.bf16 %v1795, %v1793
        %v1806 = vpack.c.bf16 %v1798, %v1796
        %v1807 = vpack.c.bf16 %v1799, %v1797
        %1808 = vmatprep.subr.bf16.mxu0 0
        %1809 = vmatpush1.bf16.msra.mxu0 %v658
        %1810 = vmatprep.subr.bf16.mxu0 0
        %1811 = vmatpush1.bf16.msra.mxu0 %v657
        %1812 = vmatprep.subr.bf16.mxu0 0
        %1813 = vmatpush1.bf16.msra.mxu0 %v656
        %1814 = vmatprep.subr.bf16.mxu0 0
        %1815 = vmatpush1.bf16.msra.mxu0 %v655
        %1816 = vmatprep.subr.bf16.mxu0 0
        %1817 = vmatpush1.bf16.msra.mxu0 %v654
        %1818 = vmatprep.subr.bf16.mxu0 0
        %1819 = vmatpush1.bf16.msra.mxu0 %v653
        %1820 = vmatprep.subr.bf16.mxu0 0
        %1821 = vmatpush1.bf16.msra.mxu0 %v652
        %1822 = vmatprep.subr.bf16.mxu0 0
        %1823 = vmatpush1.bf16.msra.mxu0 %v651
        %1824 = vmatprep.subr.bf16.mxu0 0
        %1825 = vmatpush2.bf16.msra.mxu0 %v666
        %1826 = vmatprep.subr.bf16.mxu0 0
        %1827 = vmatpush2.bf16.msra.mxu0 %v665
        %1828 = vmatprep.subr.bf16.mxu0 0
        %1829 = vmatpush2.bf16.msra.mxu0 %v664
        %1830 = vmatprep.subr.bf16.mxu0 0
        %1831 = vmatpush2.bf16.msra.mxu0 %v663
        %1832 = vmatprep.subr.bf16.mxu0 0
        %1833 = vmatpush2.bf16.msra.mxu0 %v662
        %1834 = vmatprep.subr.bf16.mxu0 0
        %1835 = vmatpush2.bf16.msra.mxu0 %v661
        %1836 = vmatprep.subr.bf16.mxu0 0
        %1837 = vmatpush2.bf16.msra.mxu0 %v660
        %1838 = vmatprep.subr.bf16.mxu0 0
        %1839 = vmatpush2.bf16.msra.mxu0 %v659
        %1840 = vmatprep.mubr.bf16.mxu0 %v1801
        %1841 = vmatmul.mubr.bf16.gmra.mxu0 %v1800
        %v1842 = vpop.f32.mrf.mxu0
        %v1843 = vadd.f32 %v585, %v1842
        %v1844 = vpop.f32.mrf.mxu0
        %v1845 = vpop.f32.mrf.mxu0
        %v1846 = vadd.f32 %v585, %v1845
        %v1847 = vpop.f32.mrf.mxu0
        %1848 = vmatprep.mubr.bf16.mxu0 %v1803
        %1849 = vmatmul.mubr.bf16.gmra.mxu0 %v1802
        %v1850 = vpop.f32.mrf.mxu0
        %v1851 = vadd.f32 %v585, %v1850
        %v1852 = vpop.f32.mrf.mxu0
        %v1853 = vpop.f32.mrf.mxu0
        %v1854 = vadd.f32 %v585, %v1853
        %v1855 = vpop.f32.mrf.mxu0
        %1856 = vmatprep.mubr.bf16.mxu0 %v1805
        %1857 = vmatmul.mubr.bf16.gmra.mxu0 %v1804
        %v1858 = vpop.f32.mrf.mxu0
        %v1859 = vadd.f32 %v585, %v1858
        %v1860 = vpop.f32.mrf.mxu0
        %v1861 = vpop.f32.mrf.mxu0
        %v1862 = vadd.f32 %v585, %v1861
        %v1863 = vpop.f32.mrf.mxu0
        %1864 = vmatprep.mubr.bf16.mxu0 %v1807
        %1865 = vmatmul.mubr.bf16.gmra.mxu0 %v1806
        %v1866 = vpop.f32.mrf.mxu0
        %v1867 = vadd.f32 %v585, %v1866
        %v1868 = vpop.f32.mrf.mxu0
        %v1869 = vpop.f32.mrf.mxu0
        %v1870 = vadd.f32 %v585, %v1869
        %v1871 = vpop.f32.mrf.mxu0
        %1872 = vdwg.mxu0
        %v1873 = vadd.f32 %v1699, %v1843
        %v1874 = vadd.f32 %v1700, %v1846
        %v1875 = vadd.f32 %v1701, %v1851
        %v1876 = vadd.f32 %v1702, %v1854
        %v1877 = vadd.f32 %v1703, %v1859
        %v1878 = vadd.f32 %v1704, %v1862
        %v1879 = vadd.f32 %v1705, %v1867
        %v1880 = vadd.f32 %v1706, %v1870
        %1881 = vadd.xlane.f32.xlu0 %v1873
        %v1882 = vpop.xlane.xlu0 %1881
        %1883 = vadd.xlane.f32.xlu0 %v1874
        %v1884 = vpop.xlane.xlu0 %1883
        %1885 = vadd.xlane.f32.xlu0 %v1875
        %v1886 = vpop.xlane.xlu0 %1885
        %1887 = vadd.xlane.f32.xlu0 %v1876
        %v1888 = vpop.xlane.xlu0 %1887
        %1889 = vadd.xlane.f32.xlu0 %v1877
        %v1890 = vpop.xlane.xlu0 %1889
        %1891 = vadd.xlane.f32.xlu0 %v1878
        %v1892 = vpop.xlane.xlu0 %1891
        %1893 = vadd.xlane.f32.xlu0 %v1879
        %v1894 = vpop.xlane.xlu0 %1893
        %1895 = vadd.xlane.f32.xlu0 %v1880
        %v1896 = vpop.xlane.xlu0 %1895
        %v1897 = vmul.f32 %v1882, %v772
        %v1898 = vmul.f32 %v1884, %v772
        %v1899 = vmul.f32 %v1886, %v772
        %v1900 = vmul.f32 %v1888, %v772
        %v1901 = vmul.f32 %v1890, %v772
        %v1902 = vmul.f32 %v1892, %v772
        %v1903 = vmul.f32 %v1894, %v772
        %v1904 = vmul.f32 %v1896, %v772
        %v1905 = vsub.f32 %v1873, %v1897
        %v1906 = vsub.f32 %v1874, %v1898
        %v1907 = vsub.f32 %v1875, %v1899
        %v1908 = vsub.f32 %v1876, %v1900
        %v1909 = vsub.f32 %v1877, %v1901
        %v1910 = vsub.f32 %v1878, %v1902
        %v1911 = vsub.f32 %v1879, %v1903
        %v1912 = vsub.f32 %v1880, %v1904
        %v1913 = vmul.f32 %v1905, %v1905
        %v1914 = vmul.f32 %v1906, %v1906
        %v1915 = vmul.f32 %v1907, %v1907
        %v1916 = vmul.f32 %v1908, %v1908
        %v1917 = vmul.f32 %v1909, %v1909
        %v1918 = vmul.f32 %v1910, %v1910
        %v1919 = vmul.f32 %v1911, %v1911
        %v1920 = vmul.f32 %v1912, %v1912
        %1921 = vadd.xlane.f32.xlu0 %v1913
        %v1922 = vpop.xlane.xlu0 %1921
        %1923 = vadd.xlane.f32.xlu0 %v1914
        %v1924 = vpop.xlane.xlu0 %1923
        %1925 = vadd.xlane.f32.xlu0 %v1915
        %v1926 = vpop.xlane.xlu0 %1925
        %1927 = vadd.xlane.f32.xlu0 %v1916
        %v1928 = vpop.xlane.xlu0 %1927
        %1929 = vadd.xlane.f32.xlu0 %v1917
        %v1930 = vpop.xlane.xlu0 %1929
        %1931 = vadd.xlane.f32.xlu0 %v1918
        %v1932 = vpop.xlane.xlu0 %1931
        %1933 = vadd.xlane.f32.xlu0 %v1919
        %v1934 = vpop.xlane.xlu0 %1933
        %1935 = vadd.xlane.f32.xlu0 %v1920
        %v1936 = vpop.xlane.xlu0 %1935
        %v1937 = vmul.f32 %v1922, %v772
        %v1938 = vmul.f32 %v1924, %v772
        %v1939 = vmul.f32 %v1926, %v772
        %v1940 = vmul.f32 %v1928, %v772
        %v1941 = vmul.f32 %v1930, %v772
        %v1942 = vmul.f32 %v1932, %v772
        %v1943 = vmul.f32 %v1934, %v772
        %v1944 = vmul.f32 %v1936, %v772
        %v1945 = vadd.f32 %v1937, 1e-05
        %v1946 = vadd.f32 %v1938, 1e-05
        %v1947 = vadd.f32 %v1939, 1e-05
        %v1948 = vadd.f32 %v1940, 1e-05
        %v1949 = vadd.f32 %v1941, 1e-05
        %v1950 = vadd.f32 %v1942, 1e-05
        %v1951 = vadd.f32 %v1943, 1e-05
        %v1952 = vadd.f32 %v1944, 1e-05
        %v1953 = vrsqrt.pop %v1945
        %v1954 = vrsqrt.pop %v1946
        %v1955 = vrsqrt.pop %v1947
        %v1956 = vrsqrt.pop %v1948
        %v1957 = vrsqrt.pop %v1949
        %v1958 = vrsqrt.pop %v1950
        %v1959 = vrsqrt.pop %v1951
        %v1960 = vrsqrt.pop %v1952
        %v1961 = vmul.f32 %v1905, %v1953
        %v1962 = vmul.f32 %v1906, %v1954
        %v1963 = vmul.f32 %v1907, %v1955
        %v1964 = vmul.f32 %v1908, %v1956
        %v1965 = vmul.f32 %v1909, %v1957
        %v1966 = vmul.f32 %v1910, %v1958
        %v1967 = vmul.f32 %v1911, %v1959
        %v1968 = vmul.f32 %v1912, %v1960
        %v1969 = vmul.f32 %v1961, %v849
        %v1970 = vmul.f32 %v1962, %v849
        %v1971 = vmul.f32 %v1963, %v849
        %v1972 = vmul.f32 %v1964, %v849
        %v1973 = vmul.f32 %v1965, %v849
        %v1974 = vmul.f32 %v1966, %v849
        %v1975 = vmul.f32 %v1967, %v849
        %v1976 = vmul.f32 %v1968, %v849
        %v1977 = vadd.f32 %v1969, %v863
        %v1978 = vadd.f32 %v1970, %v863
        %v1979 = vadd.f32 %v1971, %v863
        %v1980 = vadd.f32 %v1972, %v863
        %v1981 = vadd.f32 %v1973, %v863
        %v1982 = vadd.f32 %v1974, %v863
        %v1983 = vadd.f32 %v1975, %v863
        %v1984 = vadd.f32 %v1976, %v863
        %v1985 = vpack.c.bf16 %v1978, %v1977
        %v1986 = vpack.c.bf16 %v1980, %v1979
        %v1987 = vpack.c.bf16 %v1982, %v1981
        %v1988 = vpack.c.bf16 %v1984, %v1983
        %1989 = vmatprep.subr.bf16.mxu0 %v467
        %1990 = vmatpush1.bf16.msra.mxu0 %v466
        %1991 = vmatprep.subr.bf16.mxu0 %v465
        %1992 = vmatpush1.bf16.msra.mxu0 %v464
        %1993 = vmatprep.subr.bf16.mxu0 %v463
        %1994 = vmatpush1.bf16.msra.mxu0 %v462
        %1995 = vmatprep.subr.bf16.mxu0 %v461
        %1996 = vmatpush1.bf16.msra.mxu0 %v460
        %1997 = vmatprep.subr.bf16.mxu0 %v459
        %1998 = vmatpush1.bf16.msra.mxu0 %v458
        %1999 = vmatprep.subr.bf16.mxu0 %v457
        %2000 = vmatpush1.bf16.msra.mxu0 %v456
        %2001 = vmatprep.subr.bf16.mxu0 %v455
        %2002 = vmatpush1.bf16.msra.mxu0 %v454
        %2003 = vmatprep.subr.bf16.mxu0 %v453
        %2004 = vmatpush1.bf16.msra.mxu0 %v452
        %2005 = vmatprep.subr.bf16.mxu0 0
        %2006 = vmatpush2.bf16.msra.mxu0 0
        %2007 = vmatprep.subr.bf16.mxu0 0
        %2008 = vmatpush2.bf16.msra.mxu0 0
        %2009 = vmatprep.subr.bf16.mxu0 0
        %2010 = vmatpush2.bf16.msra.mxu0 0
        %2011 = vmatprep.subr.bf16.mxu0 0
        %2012 = vmatpush2.bf16.msra.mxu0 0
        %2013 = vmatprep.subr.bf16.mxu0 0
        %2014 = vmatpush2.bf16.msra.mxu0 0
        %2015 = vmatprep.subr.bf16.mxu0 0
        %2016 = vmatpush2.bf16.msra.mxu0 0
        %2017 = vmatprep.subr.bf16.mxu0 0
        %2018 = vmatpush2.bf16.msra.mxu0 0
        %2019 = vmatprep.subr.bf16.mxu0 0
        %2020 = vmatpush2.bf16.msra.mxu0 0
        %2021 = vmatprep.mubr.bf16.mxu0 0
        %2022 = vmatmul.mubr.bf16.gmra.mxu0 %v1985
        %v2023 = vpop.f32.mrf.mxu0
        %v2024 = vadd.f32 %v397, %v2023
        %v2025 = vpop.f32.mrf.mxu0
        %v2026 = vadd.f32 %v401, %v2025
        %v2027 = vpop.f32.mrf.mxu0
        %v2028 = vadd.f32 %v397, %v2027
        %v2029 = vpop.f32.mrf.mxu0
        %v2030 = vadd.f32 %v401, %v2029
        %2031 = vmatprep.mubr.bf16.mxu0 0
        %2032 = vmatmul.mubr.bf16.gmra.mxu0 %v1986
        %v2033 = vpop.f32.mrf.mxu0
        %v2034 = vadd.f32 %v397, %v2033
        %v2035 = vpop.f32.mrf.mxu0
        %v2036 = vadd.f32 %v401, %v2035
        %v2037 = vpop.f32.mrf.mxu0
        %v2038 = vadd.f32 %v397, %v2037
        %v2039 = vpop.f32.mrf.mxu0
        %v2040 = vadd.f32 %v401, %v2039
        %2041 = vmatprep.mubr.bf16.mxu0 0
        %2042 = vmatmul.mubr.bf16.gmra.mxu0 %v1987
        %v2043 = vpop.f32.mrf.mxu0
        %v2044 = vadd.f32 %v397, %v2043
        %v2045 = vpop.f32.mrf.mxu0
        %v2046 = vadd.f32 %v401, %v2045
        %v2047 = vpop.f32.mrf.mxu0
        %v2048 = vadd.f32 %v397, %v2047
        %v2049 = vpop.f32.mrf.mxu0
        %v2050 = vadd.f32 %v401, %v2049
        %2051 = vmatprep.mubr.bf16.mxu0 0
        %2052 = vmatmul.mubr.bf16.gmra.mxu0 %v1988
        %v2053 = vpop.f32.mrf.mxu0
        %v2054 = vadd.f32 %v397, %v2053
        %v2055 = vpop.f32.mrf.mxu0
        %v2056 = vadd.f32 %v401, %v2055
        %v2057 = vpop.f32.mrf.mxu0
        %v2058 = vadd.f32 %v397, %v2057
        %v2059 = vpop.f32.mrf.mxu0
        %v2060 = vadd.f32 %v401, %v2059
        %2061 = vdwg.mxu0
        %v2062 = vmax.f32 %v2024, 0.0
        %v2063 = vmax.f32 %v2026, 0.0
        %v2064 = vmax.f32 %v2028, 0.0
        %v2065 = vmax.f32 %v2030, 0.0
        %v2066 = vmax.f32 %v2034, 0.0
        %v2067 = vmax.f32 %v2036, 0.0
        %v2068 = vmax.f32 %v2038, 0.0
        %v2069 = vmax.f32 %v2040, 0.0
        %v2070 = vmax.f32 %v2044, 0.0
        %v2071 = vmax.f32 %v2046, 0.0
        %v2072 = vmax.f32 %v2048, 0.0
        %v2073 = vmax.f32 %v2050, 0.0
        %v2074 = vmax.f32 %v2054, 0.0
        %v2075 = vmax.f32 %v2056, 0.0
        %v2076 = vmax.f32 %v2058, 0.0
        %v2077 = vmax.f32 %v2060, 0.0
        %v2078 = vpack.c.bf16 %v2064, %v2062
        %v2079 = vpack.c.bf16 %v2065, %v2063
        %v2080 = vpack.c.bf16 %v2068, %v2066
        %v2081 = vpack.c.bf16 %v2069, %v2067
        %v2082 = vpack.c.bf16 %v2072, %v2070
        %v2083 = vpack.c.bf16 %v2073, %v2071
        %v2084 = vpack.c.bf16 %v2076, %v2074
        %v2085 = vpack.c.bf16 %v2077, %v2075
        %2086 = vmatprep.subr.bf16.mxu0 0
        %2087 = vmatpush1.bf16.msra.mxu0 %v658
        %2088 = vmatprep.subr.bf16.mxu0 0
        %2089 = vmatpush1.bf16.msra.mxu0 %v657
        %2090 = vmatprep.subr.bf16.mxu0 0
        %2091 = vmatpush1.bf16.msra.mxu0 %v656
        %2092 = vmatprep.subr.bf16.mxu0 0
        %2093 = vmatpush1.bf16.msra.mxu0 %v655
        %2094 = vmatprep.subr.bf16.mxu0 0
        %2095 = vmatpush1.bf16.msra.mxu0 %v654
        %2096 = vmatprep.subr.bf16.mxu0 0
        %2097 = vmatpush1.bf16.msra.mxu0 %v653
        %2098 = vmatprep.subr.bf16.mxu0 0
        %2099 = vmatpush1.bf16.msra.mxu0 %v652
        %2100 = vmatprep.subr.bf16.mxu0 0
        %2101 = vmatpush1.bf16.msra.mxu0 %v651
        %2102 = vmatprep.subr.bf16.mxu0 0
        %2103 = vmatpush2.bf16.msra.mxu0 %v666
        %2104 = vmatprep.subr.bf16.mxu0 0
        %2105 = vmatpush2.bf16.msra.mxu0 %v665
        %2106 = vmatprep.subr.bf16.mxu0 0
        %2107 = vmatpush2.bf16.msra.mxu0 %v664
        %2108 = vmatprep.subr.bf16.mxu0 0
        %2109 = vmatpush2.bf16.msra.mxu0 %v663
        %2110 = vmatprep.subr.bf16.mxu0 0
        %2111 = vmatpush2.bf16.msra.mxu0 %v662
        %2112 = vmatprep.subr.bf16.mxu0 0
        %2113 = vmatpush2.bf16.msra.mxu0 %v661
        %2114 = vmatprep.subr.bf16.mxu0 0
        %2115 = vmatpush2.bf16.msra.mxu0 %v660
        %2116 = vmatprep.subr.bf16.mxu0 0
        %2117 = vmatpush2.bf16.msra.mxu0 %v659
        %2118 = vmatprep.mubr.bf16.mxu0 %v2079
        %2119 = vmatmul.mubr.bf16.gmra.mxu0 %v2078
        %v2120 = vpop.f32.mrf.mxu0
        %v2121 = vadd.f32 %v585, %v2120
        %v2122 = vpop.f32.mrf.mxu0
        %v2123 = vpop.f32.mrf.mxu0
        %v2124 = vadd.f32 %v585, %v2123
        %v2125 = vpop.f32.mrf.mxu0
        %2126 = vmatprep.mubr.bf16.mxu0 %v2081
        %2127 = vmatmul.mubr.bf16.gmra.mxu0 %v2080
        %v2128 = vpop.f32.mrf.mxu0
        %v2129 = vadd.f32 %v585, %v2128
        %v2130 = vpop.f32.mrf.mxu0
        %v2131 = vpop.f32.mrf.mxu0
        %v2132 = vadd.f32 %v585, %v2131
        %v2133 = vpop.f32.mrf.mxu0
        %2134 = vmatprep.mubr.bf16.mxu0 %v2083
        %2135 = vmatmul.mubr.bf16.gmra.mxu0 %v2082
        %v2136 = vpop.f32.mrf.mxu0
        %v2137 = vadd.f32 %v585, %v2136
        %v2138 = vpop.f32.mrf.mxu0
        %v2139 = vpop.f32.mrf.mxu0
        %v2140 = vadd.f32 %v585, %v2139
        %v2141 = vpop.f32.mrf.mxu0
        %2142 = vmatprep.mubr.bf16.mxu0 %v2085
        %2143 = vmatmul.mubr.bf16.gmra.mxu0 %v2084
        %v2144 = vpop.f32.mrf.mxu0
        %v2145 = vadd.f32 %v585, %v2144
        %v2146 = vpop.f32.mrf.mxu0
        %v2147 = vpop.f32.mrf.mxu0
        %v2148 = vadd.f32 %v585, %v2147
        %v2149 = vpop.f32.mrf.mxu0
        %2150 = vdwg.mxu0
        %v2151 = vadd.f32 %v1977, %v2121
        %v2152 = vadd.f32 %v1978, %v2124
        %v2153 = vadd.f32 %v1979, %v2129
        %v2154 = vadd.f32 %v1980, %v2132
        %v2155 = vadd.f32 %v1981, %v2137
        %v2156 = vadd.f32 %v1982, %v2140
        %v2157 = vadd.f32 %v1983, %v2145
        %v2158 = vadd.f32 %v1984, %v2148
        %2159 = vadd.xlane.f32.xlu0 %v2151
        %v2160 = vpop.xlane.xlu0 %2159
        %2161 = vadd.xlane.f32.xlu0 %v2152
        %v2162 = vpop.xlane.xlu0 %2161
        %2163 = vadd.xlane.f32.xlu0 %v2153
        %v2164 = vpop.xlane.xlu0 %2163
        %2165 = vadd.xlane.f32.xlu0 %v2154
        %v2166 = vpop.xlane.xlu0 %2165
        %2167 = vadd.xlane.f32.xlu0 %v2155
        %v2168 = vpop.xlane.xlu0 %2167
        %2169 = vadd.xlane.f32.xlu0 %v2156
        %v2170 = vpop.xlane.xlu0 %2169
        %2171 = vadd.xlane.f32.xlu0 %v2157
        %v2172 = vpop.xlane.xlu0 %2171
        %2173 = vadd.xlane.f32.xlu0 %v2158
        %v2174 = vpop.xlane.xlu0 %2173
        %v2175 = vmul.f32 %v2160, %v772
        %v2176 = vmul.f32 %v2162, %v772
        %v2177 = vmul.f32 %v2164, %v772
        %v2178 = vmul.f32 %v2166, %v772
        %v2179 = vmul.f32 %v2168, %v772
        %v2180 = vmul.f32 %v2170, %v772
        %v2181 = vmul.f32 %v2172, %v772
        %v2182 = vmul.f32 %v2174, %v772
        %v2183 = vsub.f32 %v2151, %v2175
        %v2184 = vsub.f32 %v2152, %v2176
        %v2185 = vsub.f32 %v2153, %v2177
        %v2186 = vsub.f32 %v2154, %v2178
        %v2187 = vsub.f32 %v2155, %v2179
        %v2188 = vsub.f32 %v2156, %v2180
        %v2189 = vsub.f32 %v2157, %v2181
        %v2190 = vsub.f32 %v2158, %v2182
        %v2191 = vmul.f32 %v2183, %v2183
        %v2192 = vmul.f32 %v2184, %v2184
        %v2193 = vmul.f32 %v2185, %v2185
        %v2194 = vmul.f32 %v2186, %v2186
        %v2195 = vmul.f32 %v2187, %v2187
        %v2196 = vmul.f32 %v2188, %v2188
        %v2197 = vmul.f32 %v2189, %v2189
        %v2198 = vmul.f32 %v2190, %v2190
        %2199 = vadd.xlane.f32.xlu0 %v2191
        %v2200 = vpop.xlane.xlu0 %2199
        %2201 = vadd.xlane.f32.xlu0 %v2192
        %v2202 = vpop.xlane.xlu0 %2201
        %2203 = vadd.xlane.f32.xlu0 %v2193
        %v2204 = vpop.xlane.xlu0 %2203
        %2205 = vadd.xlane.f32.xlu0 %v2194
        %v2206 = vpop.xlane.xlu0 %2205
        %2207 = vadd.xlane.f32.xlu0 %v2195
        %v2208 = vpop.xlane.xlu0 %2207
        %2209 = vadd.xlane.f32.xlu0 %v2196
        %v2210 = vpop.xlane.xlu0 %2209
        %2211 = vadd.xlane.f32.xlu0 %v2197
        %v2212 = vpop.xlane.xlu0 %2211
        %2213 = vadd.xlane.f32.xlu0 %v2198
        %v2214 = vpop.xlane.xlu0 %2213
        %v2215 = vmul.f32 %v2200, %v772
        %v2216 = vmul.f32 %v2202, %v772
        %v2217 = vmul.f32 %v2204, %v772
        %v2218 = vmul.f32 %v2206, %v772
        %v2219 = vmul.f32 %v2208, %v772
        %v2220 = vmul.f32 %v2210, %v772
        %v2221 = vmul.f32 %v2212, %v772
        %v2222 = vmul.f32 %v2214, %v772
        %v2223 = vadd.f32 %v2215, 1e-05
        %v2224 = vadd.f32 %v2216, 1e-05
        %v2225 = vadd.f32 %v2217, 1e-05
        %v2226 = vadd.f32 %v2218, 1e-05
        %v2227 = vadd.f32 %v2219, 1e-05
        %v2228 = vadd.f32 %v2220, 1e-05
        %v2229 = vadd.f32 %v2221, 1e-05
        %v2230 = vadd.f32 %v2222, 1e-05
        %v2231 = vrsqrt.pop %v2223
        %v2232 = vrsqrt.pop %v2224
        %v2233 = vrsqrt.pop %v2225
        %v2234 = vrsqrt.pop %v2226
        %v2235 = vrsqrt.pop %v2227
        %v2236 = vrsqrt.pop %v2228
        %v2237 = vrsqrt.pop %v2229
        %v2238 = vrsqrt.pop %v2230
        %v2239 = vmul.f32 %v2183, %v2231
        %v2240 = vmul.f32 %v2184, %v2232
        %v2241 = vmul.f32 %v2185, %v2233
        %v2242 = vmul.f32 %v2186, %v2234
        %v2243 = vmul.f32 %v2187, %v2235
        %v2244 = vmul.f32 %v2188, %v2236
        %v2245 = vmul.f32 %v2189, %v2237
        %v2246 = vmul.f32 %v2190, %v2238
        %v2247 = vmul.f32 %v2239, %v849
        %v2248 = vmul.f32 %v2240, %v849
        %v2249 = vmul.f32 %v2241, %v849
        %v2250 = vmul.f32 %v2242, %v849
        %v2251 = vmul.f32 %v2243, %v849
        %v2252 = vmul.f32 %v2244, %v849
        %v2253 = vmul.f32 %v2245, %v849
        %v2254 = vmul.f32 %v2246, %v849
        %v2255 = vadd.f32 %v2247, %v863
        %v2256 = vadd.f32 %v2248, %v863
        %v2257 = vadd.f32 %v2249, %v863
        %v2258 = vadd.f32 %v2250, %v863
        %v2259 = vadd.f32 %v2251, %v863
        %v2260 = vadd.f32 %v2252, %v863
        %v2261 = vadd.f32 %v2253, %v863
        %v2262 = vadd.f32 %v2254, %v863
        %2263 = vst [vmem:[%s325] sm:$0xff] %v2255
        %2264 = vst [vmem:[%s325 + $0x8] sm:$0xff] %v2256
        %2265 = vst [vmem:[%s325 + $0x10] sm:$0xff] %v2257
        %2266 = vst [vmem:[%s325 + $0x18] sm:$0xff] %v2258
        %2267 = vst [vmem:[%s325 + $0x20] sm:$0xff] %v2259
        %2268 = vst [vmem:[%s325 + $0x28] sm:$0xff] %v2260
        %2269 = vst [vmem:[%s325 + $0x30] sm:$0xff] %v2261
        %2270 = vst [vmem:[%s325 + $0x38] sm:$0xff] %v2262
        %s2271 = sand.u32 %s185, 1
        %s2272 = scalar_lea.sflag [#allocation4], %s2271
        %s2273 = sand.u32 %s185, 1
        %s2274 = smul.addr %s2273, 64
        %s2275 = scalar_lea.vmem [#allocation8], %s2274
        // Predicated region
        $region61: #{_fused_encoder_2d.1} parent=47 // pred_check
          %p2276 = pneg %p195
        $region62: #{_fused_encoder_2d.1} parent=47 // pred_check_branch
          %2278 = sbr.rel (%p2276) target = $region64
        $region63: #{_fused_encoder_2d.1} parent=47 // pred_region
          %s2279 = smul.u32 8, %s25
          %s2281 = ssub.s32 1024, 1024
          %2282 = vsyncadd %s2272, %s2281
          %s2283 = smul.addr %s2279, 128
          %s2284 = scalar_lea.hbm %s7, %s2283
          %s2285 = sshll.u32 %s2275, 4
          %s2286 = int_to_ptr.vmem [resolvable:$true] %s2285
          %2291 = dma.vmem_to_hbm [thread:$0]  %s2286, 1024, %s2284, %s2272, 128, 128, 8
        $region64: #{_fused_encoder_2d.1} parent=47 // pred_fallthru
          _
      $region48: #{_fused_encoder_2d.1} parent=5 // pred_fallthru
        _
      %p2292 = scmp.le.s32.totalorder 2, %s20
      // Predicated region
      $region65: #{_fused_encoder_2d.1} parent=5 // pred_check
        %p2293 = pneg %p2292
      $region66: #{_fused_encoder_2d.1} parent=5 // pred_check_branch
        %2295 = sbr.rel (%p2293) target = $region68
      $region67: #{_fused_encoder_2d.1} parent=5 // pred_region
        %s2296 = ssub.s32 %s20, 2
        // Predicated region
        $region69: #{_fused_encoder_2d.1} parent=67 // pred_check
          %p2297 = pneg %p201
        $region70: #{_fused_encoder_2d.1} parent=67 // pred_check_branch
          %2299 = sbr.rel (%p2297) target = $region72
        $region71: #{_fused_encoder_2d.1} parent=67 // pred_region
          %s2300 = sand.u32 %s186, 1
          %s2301 = scalar_lea.sflag [#allocation4], %s2300
          %s2302 = sand.u32 %s186, 1
          %s2303 = smul.addr %s2302, 64
          %s2304 = scalar_lea.vmem [#allocation8], %s2303
          %2305 = dma.done %s2301, 1024
        $region72: #{_fused_encoder_2d.1} parent=67 // pred_fallthru
          _
      $region68: #{_fused_encoder_2d.1} parent=5 // pred_fallthru
        _
    $region6: #{_fused_encoder_2d.1} parent=1 // loop_footer
      %s24 = sadd.s32 1, %s20
    $region7: #{_fused_encoder_2d.1} parent=1 // loop_footer_branch
      %19 = sbr.rel target = $region3
    $region8: #{_fused_encoder_2d.1} parent=1 // loop_exit
      _
    %2306 = vsyncpa [#allocation3], 1
    %s2307 = scalar_lea.sflag [#allocation3], 1
    %2308 = vsyncpa %s2307, 1
    %2309 = vsyncpa [#allocation6], 1
    %2310 = vsyncpa [#allocation4], 1
    %s2311 = scalar_lea.sflag [#allocation4], 1
    %2312 = vsyncpa %s2311, 1

</llo_original>
